<compile_context>
chip_gen: v6e
topology: v6e:2x2x1
jax: 0.10.0
libtpu: 0.0.40
codegen_flags: <defaults>
</compile_context>

<pallas_src>
import functools

import jax
import jax.numpy as jnp
import numpy as np
from jax.experimental import pallas as pl
from jax.experimental.pallas import tpu as pltpu

# ---------------- configuration (mirrors QuestionAttend.__init__) ----------------
PLANES = 16          # fixed: planes = 16
N = 2                # batch
H = 8                # feature-map height
W_SP = 16            # feature-map width == config.h_size (Linear input dim)
H_SIZE = W_SP
Q_SIZE = 8           # config.q_size
DIM_WORDS = 2        # config.dim_words -> softmax axis of the squeezed (N, H, q_size)
WC = W_SP * PLANES   # fused (width * channels) lane dimension


# --------------------------- parameter preprocessing -----------------------------
def _expand_conv_weight(k_oihw, width, cin, cout, out_scale=None):
    """Fold the 3x3 conv's width (kx) taps + zero padding into per-ky dense matrices.

    Returns A (numpy) of shape (3, width*cin, width*cout) with
      A[ky, w_in*cin + c, w_out*cout + co] = K[co, c, ky, w_in - w_out + 1] * scale[co]
    for |w_in - w_out| <= 1, else 0.  `out_scale` folds eval-mode BN scale exactly.
    """
    k = np.asarray(k_oihw, np.float32)                       # (cout, cin, 3, 3)
    if out_scale is not None:
        k = k * np.asarray(out_scale, np.float32)[:, None, None, None]
    A = np.zeros((3, width * cin, width * cout), np.float32)
    for ky in range(3):
        for w_out in range(width):
            for kx in range(3):
                w_in = w_out + kx - 1
                if 0 <= w_in < width:
                    A[ky,
                      w_in * cin:(w_in + 1) * cin,
                      w_out * cout:(w_out + 1) * cout] = k[:, :, ky, kx].T
    return A


# ---------------------------------- kernel ---------------------------------------
def _question_attend_kernel(h, x_ref, qa_ref, cw_ref, b_ref, wfl_ref, blp_ref, o_ref):
    nh = x_ref.shape[0]
    # Row masks: zero rows whose ky=0 / ky=2 neighbour lies outside the image.
    # Since batch elements are stacked along the sublane axis, this also prevents
    # rows from one image leaking into the other.
    row = jax.lax.broadcasted_iota(jnp.int32, (nh, 1), 0) % h
    mask_top = (row != 0).astype(jnp.float32)         # rows with a valid "h-1" neighbour
    mask_bot = (row != (h - 1)).astype(jnp.float32)   # rows with a valid "h+1" neighbour

    def conv3x3(act, weight_at):
        # act: (NH, W*Cin); weight_at(ky): (W*Cin, W*Cout).
        # out[g] = act[g-1] @ W0 + act[g] @ W1 + act[g+1] @ W2, rows zero-padded per image.
        act_up = mask_top * pltpu.roll(act, shift=1, axis=0)        # row g -> act[g-1]
        act_dn = mask_bot * pltpu.roll(act, shift=nh - 1, axis=0)   # row g -> act[g+1]
        out = jnp.dot(act, weight_at(1), preferred_element_type=jnp.float32)
        out = out + jnp.dot(act_up, weight_at(0), preferred_element_type=jnp.float32)
        out = out + jnp.dot(act_dn, weight_at(2), preferred_element_type=jnp.float32)
        return out

    def basic_block(act, la, lb):
        hh = conv3x3(act, lambda ky: cw_ref[la, ky]) + b_ref[la]    # conv + BN (scale folded)
        hh = jnp.maximum(hh, 0.0)                                   # ReLU
        hh = conv3x3(hh, lambda ky: cw_ref[lb, ky]) + b_ref[lb]     # conv + BN (scale folded)
        return jnp.maximum(hh + act, 0.0)                           # residual + ReLU

    act = x_ref[...]                                                # (NH, W*C)
    act = basic_block(act, 0, 1)
    act = basic_block(act, 2, 3)

    # fused Conv2d(16->1, 3x3, pad=1) + Linear(h_size -> q_size): (NH, Q)
    logits = conv3x3(act, lambda ky: wfl_ref[ky]) + blp_ref[...]

    # softmax over the word (q_size) axis
    m = jnp.max(logits, axis=-1, keepdims=True)
    e = jnp.exp(logits - m)
    attn = e / jnp.sum(e, axis=-1, keepdims=True)

    o_ref[...] = qa_ref[...] * attn


# --------------------------------- wrapper ---------------------------------------
def question_attend(qa, x_nchw, params):
    n, c, h, w = x_nchw.shape
    assert c == PLANES and h == H and w == W_SP
    wc = w * c
    q = qa.shape[-1]
    nh = n * h

    # layout: NCHW -> (N*H, W*C), channel minor inside the lane axis; batch stacked
    # along the sublane axis so one kernel invocation covers the whole batch.
    x_l = jnp.transpose(x_nchw, (0, 2, 3, 1)).reshape(nh, wc).astype(jnp.float32)
    qa_2d = qa.reshape(nh, q).astype(jnp.float32)

    # conv weights with eval-mode BN scale folded into the output channels
    cw = jnp.asarray(np.stack([
        _expand_conv_weight(params[f"conv{i}_w"], w, c, c,
                            out_scale=params[f"bn{i}_scale"])
        for i in range(4)]))                                                  # (4,3,WC,WC)
    bn_b = jnp.stack([jnp.tile(params[f"bn{i}_bias"].astype(jnp.float32), w)[None, :]
                      for i in range(4)])                                     # (4,1,WC)

    # fuse Conv2d(16->1) with the Linear: wfl[ky] = Wf[ky] @ Wl, blp = bf @ Wl + bl
    wf = _expand_conv_weight(params["convf_w"], w, c, 1)                      # (3,WC,W) np
    wl = np.asarray(params["lin_w"], np.float32)                              # (W, Q)
    wfl = jnp.asarray(np.einsum("kij,jq->kiq", wf, wl))                       # (3,WC,Q)
    bf_row = np.full((1, w), float(np.asarray(params["convf_b"])[0]), np.float32)
    blp = jnp.asarray(bf_row @ wl
                      + np.asarray(params["lin_b"], np.float32)[None, :])     # (1,Q)

    out2d = pl.pallas_call(
        functools.partial(_question_attend_kernel, h),
        out_shape=jax.ShapeDtypeStruct((nh, q), jnp.float32),
    )(x_l, qa_2d, cw, bn_b, wfl, blp)
    return out2d.reshape(n, h, q)


# ------------------------- deterministic parameter init --------------------------
def init_params(key):
    ks = jax.random.split(key, 16)
    p = {}
    for i in range(4):
        p[f"conv{i}_w"] = 0.1 * jax.random.normal(ks[i], (PLANES, PLANES, 3, 3), jnp.float32)
        gamma = 1.0 + 0.1 * jax.random.normal(ks[4 + i], (PLANES,), jnp.float32)
        beta = 0.1 * jax.random.normal(ks[8 + i], (PLANES,), jnp.float32)
        # eval-mode BatchNorm folded (running_mean=0, running_var=1, eps=1e-5)
        p[f"bn{i}_scale"] = gamma / jnp.sqrt(1.0 + 1e-5)
        p[f"bn{i}_bias"] = beta
    p["convf_w"] = 0.1 * jax.random.normal(ks[12], (1, PLANES, 3, 3), jnp.float32)
    p["convf_b"] = 0.1 * jax.random.normal(ks[13], (1,), jnp.float32)
    p["lin_w"] = 0.2 * jax.random.normal(ks[14], (H_SIZE, Q_SIZE), jnp.float32)
    p["lin_b"] = 0.1 * jax.random.normal(ks[15], (Q_SIZE,), jnp.float32)
    return p


# ------------------------------ pure-JAX reference -------------------------------
def reference_forward(qa, x, p):
    prec = jax.lax.Precision.HIGHEST

    def conv(x, w, b=None):
        y = jax.lax.conv_general_dilated(x, w, (1, 1), ((1, 1), (1, 1)),
                                         dimension_numbers=("NCHW", "OIHW", "NCHW"),
                                         precision=prec)
        if b is not None:
            y = y + b[None, :, None, None]
        return y

    def bn(x, i):
        return (x * p[f"bn{i}_scale"][None, :, None, None]
                + p[f"bn{i}_bias"][None, :, None, None])

    def block(x, a, b):
        h = jax.nn.relu(bn(conv(x, p[f"conv{a}_w"]), a))
        h = bn(conv(h, p[f"conv{b}_w"]), b)
        return jax.nn.relu(h + x)

    h = block(x, 0, 1)
    h = block(h, 2, 3)
    h = conv(h, p["convf_w"], p["convf_b"])                                   # (N,1,H,W)
    h = jnp.einsum("nchw,wq->nchq", h, p["lin_w"], precision=prec) + p["lin_b"]
    x_qa = jnp.squeeze(h)                                                     # (N,H,Q)
    a = jax.nn.softmax(x_qa, axis=DIM_WORDS)
    return qa * a


# ----------------------------------- main -----------------------------------------
if __name__ == "__main__":
    key = jax.random.PRNGKey(0)
    kx, kq, kp = jax.random.split(key, 3)
    x = jax.random.normal(kx, (N, PLANES, H, W_SP), jnp.float32)   # NCHW, like PyTorch
    qa = jax.random.normal(kq, (N, H, Q_SIZE), jnp.float32)
    params = init_params(kp)

    out = question_attend(qa, x, params)
    out = jax.block_until_ready(out)

    ref = reference_forward(qa, x, params)
    assert out.shape == (N, H, Q_SIZE)
    if not bool(jnp.allclose(out, ref, rtol=5e-3, atol=5e-4)):
        raise AssertionError(
            f"mismatch vs reference, max abs err={float(jnp.max(jnp.abs(out - ref)))}")
    print("KERNEL_OK")
</pallas_src>

<mosaic_0001>
module attributes {stable_mosaic.version = 11 : i64} {
  func.func @_question_attend_kernel(%arg0: memref<16x256xf32, #tpu.memory_space<vmem>>, %arg1: memref<16x8xf32, #tpu.memory_space<vmem>>, %arg2: memref<4x3x256x256xf32, #tpu.memory_space<vmem>>, %arg3: memref<4x1x256xf32, #tpu.memory_space<vmem>>, %arg4: memref<3x256x8xf32, #tpu.memory_space<vmem>>, %arg5: memref<1x8xf32, #tpu.memory_space<vmem>>, %arg6: memref<16x8xf32, #tpu.memory_space<vmem>>) attributes {dimension_semantics = [], scalar_prefetch = 0 : i64, scratch_operands = 0 : i64, tpu.core_type = #tpu.core_type<tc>} {
    %0 = tpu.iota {dimensions = array<i32: 0>} : vector<16x1xi32>
    %c8_i32 = arith.constant 8 : i32
    %c0_i32 = arith.constant 0 : i32
    %1 = arith.cmpi eq, %c8_i32, %c0_i32 : i32
    %c1_i32 = arith.constant 1 : i32
    %2 = arith.select %1, %c1_i32, %c8_i32 : i32
    %3 = vector.broadcast %2 : i32 to vector<16x1xi32>
    %4 = arith.remsi %0, %3 : vector<16x1xi32>
    %c0_i32_0 = arith.constant 0 : i32
    %5 = vector.broadcast %c0_i32_0 : i32 to vector<16x1xi32>
    %6 = arith.cmpi ne, %4, %5 : vector<16x1xi32>
    %c0_i32_1 = arith.constant 0 : i32
    %7 = vector.broadcast %c0_i32_1 : i32 to vector<16x1xi32>
    %8 = arith.cmpi slt, %4, %7 : vector<16x1xi32>
    %c0_i32_2 = arith.constant 0 : i32
    %9 = arith.cmpi slt, %2, %c0_i32_2 : i32
    %10 = vector.broadcast %9 : i1 to vector<16x1xi1>
    %11 = vector.broadcast %10 : vector<16x1xi1> to vector<16x1xi1>
    %12 = arith.xori %8, %11 : vector<16x1xi1>
    %13 = arith.andi %12, %6 : vector<16x1xi1>
    %14 = vector.broadcast %2 : i32 to vector<16x1xi32>
    %15 = arith.addi %4, %14 : vector<16x1xi32>
    %16 = arith.select %13, %15, %4 : vector<16x1xi1>, vector<16x1xi32>
    %c0_i32_3 = arith.constant 0 : i32
    %17 = vector.broadcast %c0_i32_3 : i32 to vector<16x1xi32>
    %18 = arith.cmpi ne, %16, %17 : vector<16x1xi32>
    %19 = arith.extui %18 : vector<16x1xi1> to vector<16x1xi32>
    %20 = arith.sitofp %19 : vector<16x1xi32> to vector<16x1xf32>
    %c7_i32 = arith.constant 7 : i32
    %21 = vector.broadcast %c7_i32 : i32 to vector<16x1xi32>
    %22 = arith.cmpi ne, %16, %21 : vector<16x1xi32>
    %23 = arith.extui %22 : vector<16x1xi1> to vector<16x1xi32>
    %24 = arith.sitofp %23 : vector<16x1xi32> to vector<16x1xf32>
    %c0 = arith.constant 0 : index
    %c0_4 = arith.constant 0 : index
    %25 = vector.load %arg0[%c0, %c0_4] : memref<16x256xf32, #tpu.memory_space<vmem>>, vector<16x256xf32>
    %c1_i32_5 = arith.constant 1 : i32
    %26 = tpu.dynamic_rotate %25 by %c1_i32_5 dim 0 : vector<16x256xf32>, i32 -> vector<16x256xf32>
    %27 = vector.broadcast %20 : vector<16x1xf32> to vector<16x256xf32>
    %28 = arith.mulf %27, %26 : vector<16x256xf32>
    %c15_i32 = arith.constant 15 : i32
    %29 = tpu.dynamic_rotate %25 by %c15_i32 dim 0 : vector<16x256xf32>, i32 -> vector<16x256xf32>
    %30 = vector.broadcast %24 : vector<16x1xf32> to vector<16x256xf32>
    %31 = arith.mulf %30, %29 : vector<16x256xf32>
    %c0_6 = arith.constant 0 : index
    %c1 = arith.constant 1 : index
    %c0_7 = arith.constant 0 : index
    %c0_8 = arith.constant 0 : index
    %32 = vector.load %arg2[%c0_6, %c1, %c0_7, %c0_8] : memref<4x3x256x256xf32, #tpu.memory_space<vmem>>, vector<1x1x256x256xf32>
    %33 = vector.shape_cast %32 : vector<1x1x256x256xf32> to vector<256x256xf32>
    %cst = arith.constant dense<0.000000e+00> : vector<16x256xf32>
    %34 = tpu.matmul %25, %33, %cst {dimension_numbers = #tpu.dot_dimension_numbers<[1], [0], [0], [1], [0, 0, 1, 1], [], []>} : vector<16x256xf32>, vector<256x256xf32>, vector<16x256xf32> -> vector<16x256xf32>
    %c0_9 = arith.constant 0 : index
    %c0_10 = arith.constant 0 : index
    %c0_11 = arith.constant 0 : index
    %c0_12 = arith.constant 0 : index
    %35 = vector.load %arg2[%c0_9, %c0_10, %c0_11, %c0_12] : memref<4x3x256x256xf32, #tpu.memory_space<vmem>>, vector<1x1x256x256xf32>
    %36 = vector.shape_cast %35 : vector<1x1x256x256xf32> to vector<256x256xf32>
    %cst_13 = arith.constant dense<0.000000e+00> : vector<16x256xf32>
    %37 = tpu.matmul %28, %36, %cst_13 {dimension_numbers = #tpu.dot_dimension_numbers<[1], [0], [0], [1], [0, 0, 1, 1], [], []>} : vector<16x256xf32>, vector<256x256xf32>, vector<16x256xf32> -> vector<16x256xf32>
    %38 = arith.addf %34, %37 : vector<16x256xf32>
    %c0_14 = arith.constant 0 : index
    %c2 = arith.constant 2 : index
    %c0_15 = arith.constant 0 : index
    %c0_16 = arith.constant 0 : index
    %39 = vector.load %arg2[%c0_14, %c2, %c0_15, %c0_16] : memref<4x3x256x256xf32, #tpu.memory_space<vmem>>, vector<1x1x256x256xf32>
    %40 = vector.shape_cast %39 : vector<1x1x256x256xf32> to vector<256x256xf32>
    %cst_17 = arith.constant dense<0.000000e+00> : vector<16x256xf32>
    %41 = tpu.matmul %31, %40, %cst_17 {dimension_numbers = #tpu.dot_dimension_numbers<[1], [0], [0], [1], [0, 0, 1, 1], [], []>} : vector<16x256xf32>, vector<256x256xf32>, vector<16x256xf32> -> vector<16x256xf32>
    %42 = arith.addf %38, %41 : vector<16x256xf32>
    %c0_18 = arith.constant 0 : index
    %c0_19 = arith.constant 0 : index
    %c0_20 = arith.constant 0 : index
    %43 = vector.load %arg3[%c0_18, %c0_19, %c0_20] : memref<4x1x256xf32, #tpu.memory_space<vmem>>, vector<1x1x256xf32>
    %44 = vector.shape_cast %43 : vector<1x1x256xf32> to vector<1x256xf32>
    %45 = vector.broadcast %44 : vector<1x256xf32> to vector<16x256xf32>
    %46 = arith.addf %42, %45 : vector<16x256xf32>
    %cst_21 = arith.constant 0.000000e+00 : f32
    %47 = vector.broadcast %cst_21 : f32 to vector<16x256xf32>
    %48 = arith.maximumf %46, %47 : vector<16x256xf32>
    %c1_i32_22 = arith.constant 1 : i32
    %49 = tpu.dynamic_rotate %48 by %c1_i32_22 dim 0 : vector<16x256xf32>, i32 -> vector<16x256xf32>
    %50 = vector.broadcast %20 : vector<16x1xf32> to vector<16x256xf32>
    %51 = arith.mulf %50, %49 : vector<16x256xf32>
    %c15_i32_23 = arith.constant 15 : i32
    %52 = tpu.dynamic_rotate %48 by %c15_i32_23 dim 0 : vector<16x256xf32>, i32 -> vector<16x256xf32>
    %53 = vector.broadcast %24 : vector<16x1xf32> to vector<16x256xf32>
    %54 = arith.mulf %53, %52 : vector<16x256xf32>
    %c1_24 = arith.constant 1 : index
    %c1_25 = arith.constant 1 : index
    %c0_26 = arith.constant 0 : index
    %c0_27 = arith.constant 0 : index
    %55 = vector.load %arg2[%c1_24, %c1_25, %c0_26, %c0_27] : memref<4x3x256x256xf32, #tpu.memory_space<vmem>>, vector<1x1x256x256xf32>
    %56 = vector.shape_cast %55 : vector<1x1x256x256xf32> to vector<256x256xf32>
    %cst_28 = arith.constant dense<0.000000e+00> : vector<16x256xf32>
    %57 = tpu.matmul %48, %56, %cst_28 {dimension_numbers = #tpu.dot_dimension_numbers<[1], [0], [0], [1], [0, 0, 1, 1], [], []>} : vector<16x256xf32>, vector<256x256xf32>, vector<16x256xf32> -> vector<16x256xf32>
    %c1_29 = arith.constant 1 : index
    %c0_30 = arith.constant 0 : index
    %c0_31 = arith.constant 0 : index
    %c0_32 = arith.constant 0 : index
    %58 = vector.load %arg2[%c1_29, %c0_30, %c0_31, %c0_32] : memref<4x3x256x256xf32, #tpu.memory_space<vmem>>, vector<1x1x256x256xf32>
    %59 = vector.shape_cast %58 : vector<1x1x256x256xf32> to vector<256x256xf32>
    %cst_33 = arith.constant dense<0.000000e+00> : vector<16x256xf32>
    %60 = tpu.matmul %51, %59, %cst_33 {dimension_numbers = #tpu.dot_dimension_numbers<[1], [0], [0], [1], [0, 0, 1, 1], [], []>} : vector<16x256xf32>, vector<256x256xf32>, vector<16x256xf32> -> vector<16x256xf32>
    %61 = arith.addf %57, %60 : vector<16x256xf32>
    %c1_34 = arith.constant 1 : index
    %c2_35 = arith.constant 2 : index
    %c0_36 = arith.constant 0 : index
    %c0_37 = arith.constant 0 : index
    %62 = vector.load %arg2[%c1_34, %c2_35, %c0_36, %c0_37] : memref<4x3x256x256xf32, #tpu.memory_space<vmem>>, vector<1x1x256x256xf32>
    %63 = vector.shape_cast %62 : vector<1x1x256x256xf32> to vector<256x256xf32>
    %cst_38 = arith.constant dense<0.000000e+00> : vector<16x256xf32>
    %64 = tpu.matmul %54, %63, %cst_38 {dimension_numbers = #tpu.dot_dimension_numbers<[1], [0], [0], [1], [0, 0, 1, 1], [], []>} : vector<16x256xf32>, vector<256x256xf32>, vector<16x256xf32> -> vector<16x256xf32>
    %65 = arith.addf %61, %64 : vector<16x256xf32>
    %c1_39 = arith.constant 1 : index
    %c0_40 = arith.constant 0 : index
    %c0_41 = arith.constant 0 : index
    %66 = vector.load %arg3[%c1_39, %c0_40, %c0_41] : memref<4x1x256xf32, #tpu.memory_space<vmem>>, vector<1x1x256xf32>
    %67 = vector.shape_cast %66 : vector<1x1x256xf32> to vector<1x256xf32>
    %68 = vector.broadcast %67 : vector<1x256xf32> to vector<16x256xf32>
    %69 = arith.addf %65, %68 : vector<16x256xf32>
    %70 = arith.addf %69, %25 : vector<16x256xf32>
    %cst_42 = arith.constant 0.000000e+00 : f32
    %71 = vector.broadcast %cst_42 : f32 to vector<16x256xf32>
    %72 = arith.maximumf %70, %71 : vector<16x256xf32>
    %c1_i32_43 = arith.constant 1 : i32
    %73 = tpu.dynamic_rotate %72 by %c1_i32_43 dim 0 : vector<16x256xf32>, i32 -> vector<16x256xf32>
    %74 = vector.broadcast %20 : vector<16x1xf32> to vector<16x256xf32>
    %75 = arith.mulf %74, %73 : vector<16x256xf32>
    %c15_i32_44 = arith.constant 15 : i32
    %76 = tpu.dynamic_rotate %72 by %c15_i32_44 dim 0 : vector<16x256xf32>, i32 -> vector<16x256xf32>
    %77 = vector.broadcast %24 : vector<16x1xf32> to vector<16x256xf32>
    %78 = arith.mulf %77, %76 : vector<16x256xf32>
    %c2_45 = arith.constant 2 : index
    %c1_46 = arith.constant 1 : index
    %c0_47 = arith.constant 0 : index
    %c0_48 = arith.constant 0 : index
    %79 = vector.load %arg2[%c2_45, %c1_46, %c0_47, %c0_48] : memref<4x3x256x256xf32, #tpu.memory_space<vmem>>, vector<1x1x256x256xf32>
    %80 = vector.shape_cast %79 : vector<1x1x256x256xf32> to vector<256x256xf32>
    %cst_49 = arith.constant dense<0.000000e+00> : vector<16x256xf32>
    %81 = tpu.matmul %72, %80, %cst_49 {dimension_numbers = #tpu.dot_dimension_numbers<[1], [0], [0], [1], [0, 0, 1, 1], [], []>} : vector<16x256xf32>, vector<256x256xf32>, vector<16x256xf32> -> vector<16x256xf32>
    %c2_50 = arith.constant 2 : index
    %c0_51 = arith.constant 0 : index
    %c0_52 = arith.constant 0 : index
    %c0_53 = arith.constant 0 : index
    %82 = vector.load %arg2[%c2_50, %c0_51, %c0_52, %c0_53] : memref<4x3x256x256xf32, #tpu.memory_space<vmem>>, vector<1x1x256x256xf32>
    %83 = vector.shape_cast %82 : vector<1x1x256x256xf32> to vector<256x256xf32>
    %cst_54 = arith.constant dense<0.000000e+00> : vector<16x256xf32>
    %84 = tpu.matmul %75, %83, %cst_54 {dimension_numbers = #tpu.dot_dimension_numbers<[1], [0], [0], [1], [0, 0, 1, 1], [], []>} : vector<16x256xf32>, vector<256x256xf32>, vector<16x256xf32> -> vector<16x256xf32>
    %85 = arith.addf %81, %84 : vector<16x256xf32>
    %c2_55 = arith.constant 2 : index
    %c2_56 = arith.constant 2 : index
    %c0_57 = arith.constant 0 : index
    %c0_58 = arith.constant 0 : index
    %86 = vector.load %arg2[%c2_55, %c2_56, %c0_57, %c0_58] : memref<4x3x256x256xf32, #tpu.memory_space<vmem>>, vector<1x1x256x256xf32>
    %87 = vector.shape_cast %86 : vector<1x1x256x256xf32> to vector<256x256xf32>
    %cst_59 = arith.constant dense<0.000000e+00> : vector<16x256xf32>
    %88 = tpu.matmul %78, %87, %cst_59 {dimension_numbers = #tpu.dot_dimension_numbers<[1], [0], [0], [1], [0, 0, 1, 1], [], []>} : vector<16x256xf32>, vector<256x256xf32>, vector<16x256xf32> -> vector<16x256xf32>
    %89 = arith.addf %85, %88 : vector<16x256xf32>
    %c2_60 = arith.constant 2 : index
    %c0_61 = arith.constant 0 : index
    %c0_62 = arith.constant 0 : index
    %90 = vector.load %arg3[%c2_60, %c0_61, %c0_62] : memref<4x1x256xf32, #tpu.memory_space<vmem>>, vector<1x1x256xf32>
    %91 = vector.shape_cast %90 : vector<1x1x256xf32> to vector<1x256xf32>
    %92 = vector.broadcast %91 : vector<1x256xf32> to vector<16x256xf32>
    %93 = arith.addf %89, %92 : vector<16x256xf32>
    %cst_63 = arith.constant 0.000000e+00 : f32
    %94 = vector.broadcast %cst_63 : f32 to vector<16x256xf32>
    %95 = arith.maximumf %93, %94 : vector<16x256xf32>
    %c1_i32_64 = arith.constant 1 : i32
    %96 = tpu.dynamic_rotate %95 by %c1_i32_64 dim 0 : vector<16x256xf32>, i32 -> vector<16x256xf32>
    %97 = vector.broadcast %20 : vector<16x1xf32> to vector<16x256xf32>
    %98 = arith.mulf %97, %96 : vector<16x256xf32>
    %c15_i32_65 = arith.constant 15 : i32
    %99 = tpu.dynamic_rotate %95 by %c15_i32_65 dim 0 : vector<16x256xf32>, i32 -> vector<16x256xf32>
    %100 = vector.broadcast %24 : vector<16x1xf32> to vector<16x256xf32>
    %101 = arith.mulf %100, %99 : vector<16x256xf32>
    %c3 = arith.constant 3 : index
    %c1_66 = arith.constant 1 : index
    %c0_67 = arith.constant 0 : index
    %c0_68 = arith.constant 0 : index
    %102 = vector.load %arg2[%c3, %c1_66, %c0_67, %c0_68] : memref<4x3x256x256xf32, #tpu.memory_space<vmem>>, vector<1x1x256x256xf32>
    %103 = vector.shape_cast %102 : vector<1x1x256x256xf32> to vector<256x256xf32>
    %cst_69 = arith.constant dense<0.000000e+00> : vector<16x256xf32>
    %104 = tpu.matmul %95, %103, %cst_69 {dimension_numbers = #tpu.dot_dimension_numbers<[1], [0], [0], [1], [0, 0, 1, 1], [], []>} : vector<16x256xf32>, vector<256x256xf32>, vector<16x256xf32> -> vector<16x256xf32>
    %c3_70 = arith.constant 3 : index
    %c0_71 = arith.constant 0 : index
    %c0_72 = arith.constant 0 : index
    %c0_73 = arith.constant 0 : index
    %105 = vector.load %arg2[%c3_70, %c0_71, %c0_72, %c0_73] : memref<4x3x256x256xf32, #tpu.memory_space<vmem>>, vector<1x1x256x256xf32>
    %106 = vector.shape_cast %105 : vector<1x1x256x256xf32> to vector<256x256xf32>
    %cst_74 = arith.constant dense<0.000000e+00> : vector<16x256xf32>
    %107 = tpu.matmul %98, %106, %cst_74 {dimension_numbers = #tpu.dot_dimension_numbers<[1], [0], [0], [1], [0, 0, 1, 1], [], []>} : vector<16x256xf32>, vector<256x256xf32>, vector<16x256xf32> -> vector<16x256xf32>
    %108 = arith.addf %104, %107 : vector<16x256xf32>
    %c3_75 = arith.constant 3 : index
    %c2_76 = arith.constant 2 : index
    %c0_77 = arith.constant 0 : index
    %c0_78 = arith.constant 0 : index
    %109 = vector.load %arg2[%c3_75, %c2_76, %c0_77, %c0_78] : memref<4x3x256x256xf32, #tpu.memory_space<vmem>>, vector<1x1x256x256xf32>
    %110 = vector.shape_cast %109 : vector<1x1x256x256xf32> to vector<256x256xf32>
    %cst_79 = arith.constant dense<0.000000e+00> : vector<16x256xf32>
    %111 = tpu.matmul %101, %110, %cst_79 {dimension_numbers = #tpu.dot_dimension_numbers<[1], [0], [0], [1], [0, 0, 1, 1], [], []>} : vector<16x256xf32>, vector<256x256xf32>, vector<16x256xf32> -> vector<16x256xf32>
    %112 = arith.addf %108, %111 : vector<16x256xf32>
    %c3_80 = arith.constant 3 : index
    %c0_81 = arith.constant 0 : index
    %c0_82 = arith.constant 0 : index
    %113 = vector.load %arg3[%c3_80, %c0_81, %c0_82] : memref<4x1x256xf32, #tpu.memory_space<vmem>>, vector<1x1x256xf32>
    %114 = vector.shape_cast %113 : vector<1x1x256xf32> to vector<1x256xf32>
    %115 = vector.broadcast %114 : vector<1x256xf32> to vector<16x256xf32>
    %116 = arith.addf %112, %115 : vector<16x256xf32>
    %117 = arith.addf %116, %72 : vector<16x256xf32>
    %cst_83 = arith.constant 0.000000e+00 : f32
    %118 = vector.broadcast %cst_83 : f32 to vector<16x256xf32>
    %119 = arith.maximumf %117, %118 : vector<16x256xf32>
    %c1_i32_84 = arith.constant 1 : i32
    %120 = tpu.dynamic_rotate %119 by %c1_i32_84 dim 0 : vector<16x256xf32>, i32 -> vector<16x256xf32>
    %121 = vector.broadcast %20 : vector<16x1xf32> to vector<16x256xf32>
    %122 = arith.mulf %121, %120 : vector<16x256xf32>
    %c15_i32_85 = arith.constant 15 : i32
    %123 = tpu.dynamic_rotate %119 by %c15_i32_85 dim 0 : vector<16x256xf32>, i32 -> vector<16x256xf32>
    %124 = vector.broadcast %24 : vector<16x1xf32> to vector<16x256xf32>
    %125 = arith.mulf %124, %123 : vector<16x256xf32>
    %c1_86 = arith.constant 1 : index
    %c0_87 = arith.constant 0 : index
    %c0_88 = arith.constant 0 : index
    %126 = vector.load %arg4[%c1_86, %c0_87, %c0_88] : memref<3x256x8xf32, #tpu.memory_space<vmem>>, vector<1x256x8xf32>
    %127 = vector.shape_cast %126 : vector<1x256x8xf32> to vector<256x8xf32>
    %cst_89 = arith.constant dense<0.000000e+00> : vector<16x8xf32>
    %128 = tpu.matmul %119, %127, %cst_89 {dimension_numbers = #tpu.dot_dimension_numbers<[1], [0], [0], [1], [0, 0, 1, 1], [], []>} : vector<16x256xf32>, vector<256x8xf32>, vector<16x8xf32> -> vector<16x8xf32>
    %c0_90 = arith.constant 0 : index
    %c0_91 = arith.constant 0 : index
    %c0_92 = arith.constant 0 : index
    %129 = vector.load %arg4[%c0_90, %c0_91, %c0_92] : memref<3x256x8xf32, #tpu.memory_space<vmem>>, vector<1x256x8xf32>
    %130 = vector.shape_cast %129 : vector<1x256x8xf32> to vector<256x8xf32>
    %cst_93 = arith.constant dense<0.000000e+00> : vector<16x8xf32>
    %131 = tpu.matmul %122, %130, %cst_93 {dimension_numbers = #tpu.dot_dimension_numbers<[1], [0], [0], [1], [0, 0, 1, 1], [], []>} : vector<16x256xf32>, vector<256x8xf32>, vector<16x8xf32> -> vector<16x8xf32>
    %132 = arith.addf %128, %131 : vector<16x8xf32>
    %c2_94 = arith.constant 2 : index
    %c0_95 = arith.constant 0 : index
    %c0_96 = arith.constant 0 : index
    %133 = vector.load %arg4[%c2_94, %c0_95, %c0_96] : memref<3x256x8xf32, #tpu.memory_space<vmem>>, vector<1x256x8xf32>
    %134 = vector.shape_cast %133 : vector<1x256x8xf32> to vector<256x8xf32>
    %cst_97 = arith.constant dense<0.000000e+00> : vector<16x8xf32>
    %135 = tpu.matmul %125, %134, %cst_97 {dimension_numbers = #tpu.dot_dimension_numbers<[1], [0], [0], [1], [0, 0, 1, 1], [], []>} : vector<16x256xf32>, vector<256x8xf32>, vector<16x8xf32> -> vector<16x8xf32>
    %136 = arith.addf %132, %135 : vector<16x8xf32>
    %c0_98 = arith.constant 0 : index
    %c0_99 = arith.constant 0 : index
    %137 = vector.load %arg5[%c0_98, %c0_99] : memref<1x8xf32, #tpu.memory_space<vmem>>, vector<1x8xf32>
    %138 = vector.broadcast %137 : vector<1x8xf32> to vector<16x8xf32>
    %139 = arith.addf %136, %138 : vector<16x8xf32>
    %cst_100 = arith.constant dense<0xFF800000> : vector<16xf32>
    %140 = vector.multi_reduction <maximumf>, %139, %cst_100 [1] : vector<16x8xf32> to vector<16xf32>
    %141 = vector.shape_cast %140 : vector<16xf32> to vector<16x1xf32>
    %142 = vector.broadcast %141 : vector<16x1xf32> to vector<16x8xf32>
    %143 = arith.subf %139, %142 : vector<16x8xf32>
    %144 = math.exp %143 : vector<16x8xf32>
    %cst_101 = arith.constant dense<0.000000e+00> : vector<16xf32>
    %145 = vector.multi_reduction <add>, %144, %cst_101 [1] : vector<16x8xf32> to vector<16xf32>
    %146 = vector.shape_cast %145 : vector<16xf32> to vector<16x1xf32>
    %147 = vector.broadcast %146 : vector<16x1xf32> to vector<16x8xf32>
    %148 = arith.divf %144, %147 : vector<16x8xf32>
    %c0_102 = arith.constant 0 : index
    %c0_103 = arith.constant 0 : index
    %149 = vector.load %arg1[%c0_102, %c0_103] : memref<16x8xf32, #tpu.memory_space<vmem>>, vector<16x8xf32>
    %150 = arith.mulf %149, %148 : vector<16x8xf32>
    %c0_104 = arith.constant 0 : index
    %c0_105 = arith.constant 0 : index
    %151 = vector.load %arg6[%c0_104, %c0_105] : memref<16x8xf32, #tpu.memory_space<vmem>>, vector<16x8xf32>
    tpu.vector_store %arg6[%c0_104, %c0_105], %150 {strides = array<i32>} : memref<16x8xf32, #tpu.memory_space<vmem>>, vector<16x8xf32>,
    return
  }
}

</mosaic_0001>

<llo_original>
// kernel: tpu_custom_call.1
$region0: #{tpu_custom_call.1}
  #allocation0 [shape = 'u32[]', space=smem, size = 0x4, offset = 0x4, fixed_abs, tag = 'smem constant byte address 0x4 - core index']
  #allocation1 [shape = 'u32[144,128]{1,0:T(1,128)}', space=vmem, size = 0x12000, scoped, tag = 'internal scratch']
  %s0 = inlined_call_operand.hbm [shape: f32[16,256], index: 0, kind: input, shape index: {}]
  %s1 = inlined_call_operand.vmem [shape: f32[16,8], index: 1, kind: input, shape index: {}]
  %s2 = inlined_call_operand.hbm [shape: f32[4,3,256,256], index: 2, kind: input, shape index: {}]
  %s3 = inlined_call_operand.hbm [shape: f32[4,1,256], index: 3, kind: input, shape index: {}]
  %s4 = inlined_call_operand.vmem [shape: f32[3,256,8], index: 4, kind: input, shape index: {}]
  %s5 = inlined_call_operand.hbm [shape: f32[1,8], index: 5, kind: input, shape index: {}]
  %s6 = inlined_call_operand.vmem [shape: f32[16,8], index: 6, kind: output, shape index: {}]
  %s7 = sld [smem:[#allocation0]]
  $region50: #{tpu_custom_call.1} parent=0
    _
  %s9 = ssub.s32 1, %s7
  %s10 = scalar_select 0, %s9, %s7
  $region1: #{tpu_custom_call.1} parent=0
    #allocation2 [shape = 'u8[16384]{0}', space=vmem, size = 0x4000, scoped, tag = 'input window, operand 0, single buffered']
    #allocation3 [shape = 's32[1]{0}', space=sflag, size = 0x4, scoped, tag = 'scoped memory for tpu_custom_call.1']
    #allocation4 [shape = 'u8[3145728]{0}', space=vmem, size = 0x300000, scoped, tag = 'input window, operand 2, single buffered']
    #allocation5 [shape = 's32[1]{0}', space=sflag, size = 0x4, scoped, tag = 'scoped memory for tpu_custom_call.1']
    #allocation6 [shape = 'u8[4096]{0}', space=vmem, size = 0x1000, scoped, tag = 'input window, operand 3, single buffered']
    #allocation7 [shape = 'u8[512]{0}', space=vmem, size = 0x400, scoped, tag = 'input window, operand 5, single buffered']
    #allocation8 [shape = 's32[1]{0}', space=sflag, size = 0x4, scoped, tag = 'scoped memory for tpu_custom_call.1']
    %11 = vsyncpa [#allocation3], 0
    %12 = vsyncpa [#allocation5], 0
    %13 = vsyncpa [#allocation8], 0
    // Predicated region
    $region2: #{tpu_custom_call.1} parent=1 // pred_check
      _
    $region3: #{tpu_custom_call.1} parent=1 // pred_check_branch
      %15 = sbr.rel (0) target = $region5
    $region4: #{tpu_custom_call.1} parent=1 // pred_region
      %s17 = ssub.s32 512, 512
      %18 = vsyncadd [#allocation3], %s17
      %s19 = sshll.u32 [#allocation2], 4
      %s20 = int_to_ptr.vmem [resolvable:$true] %s19
      %25 = dma.hbm_to_vmem [thread:$0]  %s0, 512, %s20, [#allocation3], 256, 256, 16
    $region5: #{tpu_custom_call.1} parent=1 // pred_fallthru
      _
    // Predicated region
    $region6: #{tpu_custom_call.1} parent=1 // pred_check
      _
    $region7: #{tpu_custom_call.1} parent=1 // pred_check_branch
      %27 = sbr.rel (0) target = $region9
    $region8: #{tpu_custom_call.1} parent=1 // pred_region
      _
    $region9: #{tpu_custom_call.1} parent=1 // pred_fallthru
      _
    // Predicated region
    $region10: #{tpu_custom_call.1} parent=1 // pred_check
      _
    $region11: #{tpu_custom_call.1} parent=1 // pred_check_branch
      %29 = sbr.rel (0) target = $region13
    $region12: #{tpu_custom_call.1} parent=1 // pred_region
      %s31 = ssub.s32 98304, 98304
      %32 = vsyncadd [#allocation5], %s31
      %s33 = sshll.u32 [#allocation4], 4
      %s34 = int_to_ptr.vmem [resolvable:$true] %s33
      %39 = dma.hbm_to_vmem [thread:$0]  %s2, 98304, %s34, [#allocation5], 256, 256, 16
    $region13: #{tpu_custom_call.1} parent=1 // pred_fallthru
      _
    // Predicated region
    $region14: #{tpu_custom_call.1} parent=1 // pred_check
      _
    $region15: #{tpu_custom_call.1} parent=1 // pred_check_branch
      %41 = sbr.rel (0) target = $region17
    $region16: #{tpu_custom_call.1} parent=1 // pred_region
      %s43 = ssub.s32 128, 128
      %44 = vsyncadd [#allocation5], %s43
      %s45 = sshll.u32 [#allocation6], 4
      %s46 = int_to_ptr.vmem [resolvable:$true] %s45
      %51 = dma.hbm_to_vmem [thread:$0]  %s3, 128, %s46, [#allocation5], 32, 32, 2
    $region17: #{tpu_custom_call.1} parent=1 // pred_fallthru
      _
    // Predicated region
    $region18: #{tpu_custom_call.1} parent=1 // pred_check
      _
    $region19: #{tpu_custom_call.1} parent=1 // pred_check_branch
      %53 = sbr.rel (0) target = $region21
    $region20: #{tpu_custom_call.1} parent=1 // pred_region
      _
    $region21: #{tpu_custom_call.1} parent=1 // pred_fallthru
      _
    // Predicated region
    $region22: #{tpu_custom_call.1} parent=1 // pred_check
      _
    $region23: #{tpu_custom_call.1} parent=1 // pred_check_branch
      %55 = sbr.rel (0) target = $region25
    $region24: #{tpu_custom_call.1} parent=1 // pred_region
      %s57 = ssub.s32 16, 16
      %58 = vsyncadd [#allocation8], %s57
      %s60 = sshll.u32 [#allocation7], 4
      %s61 = int_to_ptr.vmem [resolvable:$true] %s60
      %63 = dma.hbm_to_vmem [thread:$0]  %s5, 16, %s61, [#allocation8]
    $region25: #{tpu_custom_call.1} parent=1 // pred_fallthru
      _
    // Predicated region
    $region26: #{tpu_custom_call.1} parent=1 // pred_check
      _
    $region27: #{tpu_custom_call.1} parent=1 // pred_check_branch
      %65 = sbr.rel (0) target = $region29
    $region28: #{tpu_custom_call.1} parent=1 // pred_region
      %66 = dma.done [#allocation3], 512
    $region29: #{tpu_custom_call.1} parent=1 // pred_fallthru
      _
    // Predicated region
    $region30: #{tpu_custom_call.1} parent=1 // pred_check
      _
    $region31: #{tpu_custom_call.1} parent=1 // pred_check_branch
      %68 = sbr.rel (0) target = $region33
    $region32: #{tpu_custom_call.1} parent=1 // pred_region
      %69 = dma.done [#allocation5], 98304
    $region33: #{tpu_custom_call.1} parent=1 // pred_fallthru
      _
    // Predicated region
    $region34: #{tpu_custom_call.1} parent=1 // pred_check
      _
    $region35: #{tpu_custom_call.1} parent=1 // pred_check_branch
      %71 = sbr.rel (0) target = $region37
    $region36: #{tpu_custom_call.1} parent=1 // pred_region
      %72 = dma.done [#allocation5], 128
    $region37: #{tpu_custom_call.1} parent=1 // pred_fallthru
      _
    // Predicated region
    $region38: #{tpu_custom_call.1} parent=1 // pred_check
      _
    $region39: #{tpu_custom_call.1} parent=1 // pred_check_branch
      %74 = sbr.rel (0) target = $region41
    $region40: #{tpu_custom_call.1} parent=1 // pred_region
      %75 = dma.done [#allocation8], 16
    $region41: #{tpu_custom_call.1} parent=1 // pred_fallthru
      _
    %v76 = vlaneseq
    %v77 = vshrl.u32 %v76, 7
    %v78 = vadd.s32 %v77, 8
    %vm79 = vcmp.lt.s32.totalorder %v77, 0
    %v80 = vsub.s32 0, %v77
    %v81 = vsel %vm79, %v80, %v77
    %v82 = vshrl.u32 %v81, 3
    %v83 = vand.u32 %v81, 7
    %v84 = vsub.s32 0, %v83
    %v85 = vsel %vm79, %v84, %v83
    %vm86 = vcmp.lt.s32.totalorder %v78, 0
    %v87 = vsub.s32 0, %v78
    %v88 = vsel %vm86, %v87, %v78
    %v89 = vshrl.u32 %v88, 3
    %v90 = vand.u32 %v88, 7
    %v91 = vsub.s32 0, %v90
    %v92 = vsel %vm86, %v91, %v90
    %vm93 = vcmp.ne.s32.totalorder %v85, 0
    %vm94 = vcmp.ne.s32.totalorder %v92, 0
    %vm95 = vcmp.lt.s32.totalorder %v85, 0
    %vm96 = vcmp.lt.s32.totalorder %v92, 0
    %vm97 = vmand %vm95, %vm93
    %vm98 = vmand %vm96, %vm94
    %v99 = vadd.s32 %v85, 8
    %v100 = vadd.s32 %v92, 8
    %v101 = vsel %vm97, %v99, %v85
    %v102 = vsel %vm98, %v100, %v92
    %vm103 = vcmp.ne.s32.totalorder %v101, 0
    %vm104 = vcmp.ne.s32.totalorder %v102, 0
    %v105 = vsel %vm103, 1, 0
    %v106 = vsel %vm104, 1, 0
    %v107 = vcvt.s32.f32 %v105
    %v108 = vcvt.s32.f32 %v106
    %vm109 = vcmp.ne.s32.totalorder %v101, 7
    %vm110 = vcmp.ne.s32.totalorder %v102, 7
    %v111 = vsel %vm109, 1, 0
    %v112 = vsel %vm110, 1, 0
    %v113 = vcvt.s32.f32 %v111
    %v114 = vcvt.s32.f32 %v112
    %v115 = vld [vmem:[#allocation2] sm:$0xff]
    %v116 = vld [vmem:[#allocation2 + $0x8] sm:$0xff]
    %v117 = vld [vmem:[#allocation2 + $0x10] sm:$0xff]
    %v118 = vld [vmem:[#allocation2 + $0x18] sm:$0xff]
    %v119 = vrot.slane %v115, 7
    %v120 = vrot.slane %v116, 7
    %v121 = vrot.slane %v117, 7
    %v122 = vrot.slane %v118, 7
    %vm123 = vcmp.lt.s32.totalorder %v77, 1
    %v124 = vsel %vm123, %v119, %v121
    %v125 = vsel %vm123, %v120, %v122
    %v126 = vsel %vm123, %v121, %v119
    %v127 = vsel %vm123, %v122, %v120
    %v128 = vmul.f32 %v107, %v126
    %v129 = vmul.f32 %v107, %v127
    %v130 = vmul.f32 %v108, %v124
    %v131 = vmul.f32 %v108, %v125
    %v132 = vrot.slane %v115, 1
    %v133 = vrot.slane %v116, 1
    %v134 = vrot.slane %v117, 1
    %v135 = vrot.slane %v118, 1
    %vm136 = vcmp.lt.s32.totalorder %v77, 7
    %v137 = vsel %vm136, %v132, %v134
    %v138 = vsel %vm136, %v133, %v135
    %v139 = vsel %vm136, %v134, %v132
    %v140 = vsel %vm136, %v135, %v133
    %v141 = vmul.f32 %v113, %v137
    %v142 = vmul.f32 %v113, %v138
    %v143 = vmul.f32 %v114, %v139
    %v144 = vmul.f32 %v114, %v140
    %s145 = scalar_lea.vmem [#allocation4], 512
    %v146 = vld [vmem:[%s145] sm:$0xff]
    %v147 = vld [vmem:[%s145 + $0x8] sm:$0xff]
    %v148 = vld [vmem:[%s145 + $0x10] sm:$0xff]
    %v149 = vld [vmem:[%s145 + $0x18] sm:$0xff]
    %v150 = vld [vmem:[%s145 + $0x20] sm:$0xff]
    %v151 = vld [vmem:[%s145 + $0x28] sm:$0xff]
    %v152 = vld [vmem:[%s145 + $0x30] sm:$0xff]
    %v153 = vld [vmem:[%s145 + $0x38] sm:$0xff]
    %v154 = vld [vmem:[%s145 + $0x40] sm:$0xff]
    %v155 = vld [vmem:[%s145 + $0x48] sm:$0xff]
    %v156 = vld [vmem:[%s145 + $0x50] sm:$0xff]
    %v157 = vld [vmem:[%s145 + $0x58] sm:$0xff]
    %v158 = vld [vmem:[%s145 + $0x60] sm:$0xff]
    %v159 = vld [vmem:[%s145 + $0x68] sm:$0xff]
    %v160 = vld [vmem:[%s145 + $0x70] sm:$0xff]
    %v161 = vld [vmem:[%s145 + $0x78] sm:$0xff]
    %v162 = vld [vmem:[%s145 + $0x80] sm:$0xff]
    %v163 = vld [vmem:[%s145 + $0x88] sm:$0xff]
    %v164 = vld [vmem:[%s145 + $0x90] sm:$0xff]
    %v165 = vld [vmem:[%s145 + $0x98] sm:$0xff]
    %v166 = vld [vmem:[%s145 + $0xa0] sm:$0xff]
    %v167 = vld [vmem:[%s145 + $0xa8] sm:$0xff]
    %v168 = vld [vmem:[%s145 + $0xb0] sm:$0xff]
    %v169 = vld [vmem:[%s145 + $0xb8] sm:$0xff]
    %v170 = vld [vmem:[%s145 + $0xc0] sm:$0xff]
    %v171 = vld [vmem:[%s145 + $0xc8] sm:$0xff]
    %v172 = vld [vmem:[%s145 + $0xd0] sm:$0xff]
    %v173 = vld [vmem:[%s145 + $0xd8] sm:$0xff]
    %v174 = vld [vmem:[%s145 + $0xe0] sm:$0xff]
    %v175 = vld [vmem:[%s145 + $0xe8] sm:$0xff]
    %v176 = vld [vmem:[%s145 + $0xf0] sm:$0xff]
    %v177 = vld [vmem:[%s145 + $0xf8] sm:$0xff]
    %v178 = vld [vmem:[%s145 + $0x100] sm:$0xff]
    %v179 = vld [vmem:[%s145 + $0x108] sm:$0xff]
    %v180 = vld [vmem:[%s145 + $0x110] sm:$0xff]
    %v181 = vld [vmem:[%s145 + $0x118] sm:$0xff]
    %v182 = vld [vmem:[%s145 + $0x120] sm:$0xff]
    %v183 = vld [vmem:[%s145 + $0x128] sm:$0xff]
    %v184 = vld [vmem:[%s145 + $0x130] sm:$0xff]
    %v185 = vld [vmem:[%s145 + $0x138] sm:$0xff]
    %v186 = vld [vmem:[%s145 + $0x140] sm:$0xff]
    %v187 = vld [vmem:[%s145 + $0x148] sm:$0xff]
    %v188 = vld [vmem:[%s145 + $0x150] sm:$0xff]
    %v189 = vld [vmem:[%s145 + $0x158] sm:$0xff]
    %v190 = vld [vmem:[%s145 + $0x160] sm:$0xff]
    %v191 = vld [vmem:[%s145 + $0x168] sm:$0xff]
    %v192 = vld [vmem:[%s145 + $0x170] sm:$0xff]
    %v193 = vld [vmem:[%s145 + $0x178] sm:$0xff]
    %v194 = vld [vmem:[%s145 + $0x180] sm:$0xff]
    %v195 = vld [vmem:[%s145 + $0x188] sm:$0xff]
    %v196 = vld [vmem:[%s145 + $0x190] sm:$0xff]
    %v197 = vld [vmem:[%s145 + $0x198] sm:$0xff]
    %v198 = vld [vmem:[%s145 + $0x1a0] sm:$0xff]
    %v199 = vld [vmem:[%s145 + $0x1a8] sm:$0xff]
    %v200 = vld [vmem:[%s145 + $0x1b0] sm:$0xff]
    %v201 = vld [vmem:[%s145 + $0x1b8] sm:$0xff]
    %v202 = vld [vmem:[%s145 + $0x1c0] sm:$0xff]
    %v203 = vld [vmem:[%s145 + $0x1c8] sm:$0xff]
    %v204 = vld [vmem:[%s145 + $0x1d0] sm:$0xff]
    %v205 = vld [vmem:[%s145 + $0x1d8] sm:$0xff]
    %v206 = vld [vmem:[%s145 + $0x1e0] sm:$0xff]
    %v207 = vld [vmem:[%s145 + $0x1e8] sm:$0xff]
    %v208 = vld [vmem:[%s145 + $0x1f0] sm:$0xff]
    %v209 = vld [vmem:[%s145 + $0x1f8] sm:$0xff]
    %v210 = vld [vmem:[#allocation4] sm:$0xff]
    %v211 = vld [vmem:[#allocation4 + $0x8] sm:$0xff]
    %v212 = vld [vmem:[#allocation4 + $0x10] sm:$0xff]
    %v213 = vld [vmem:[#allocation4 + $0x18] sm:$0xff]
    %v214 = vld [vmem:[#allocation4 + $0x20] sm:$0xff]
    %v215 = vld [vmem:[#allocation4 + $0x28] sm:$0xff]
    %v216 = vld [vmem:[#allocation4 + $0x30] sm:$0xff]
    %v217 = vld [vmem:[#allocation4 + $0x38] sm:$0xff]
    %v218 = vld [vmem:[#allocation4 + $0x40] sm:$0xff]
    %v219 = vld [vmem:[#allocation4 + $0x48] sm:$0xff]
    %v220 = vld [vmem:[#allocation4 + $0x50] sm:$0xff]
    %v221 = vld [vmem:[#allocation4 + $0x58] sm:$0xff]
    %v222 = vld [vmem:[#allocation4 + $0x60] sm:$0xff]
    %v223 = vld [vmem:[#allocation4 + $0x68] sm:$0xff]
    %v224 = vld [vmem:[#allocation4 + $0x70] sm:$0xff]
    %v225 = vld [vmem:[#allocation4 + $0x78] sm:$0xff]
    %v226 = vld [vmem:[#allocation4 + $0x80] sm:$0xff]
    %v227 = vld [vmem:[#allocation4 + $0x88] sm:$0xff]
    %v228 = vld [vmem:[#allocation4 + $0x90] sm:$0xff]
    %v229 = vld [vmem:[#allocation4 + $0x98] sm:$0xff]
    %v230 = vld [vmem:[#allocation4 + $0xa0] sm:$0xff]
    %v231 = vld [vmem:[#allocation4 + $0xa8] sm:$0xff]
    %v232 = vld [vmem:[#allocation4 + $0xb0] sm:$0xff]
    %v233 = vld [vmem:[#allocation4 + $0xb8] sm:$0xff]
    %v234 = vld [vmem:[#allocation4 + $0xc0] sm:$0xff]
    %v235 = vld [vmem:[#allocation4 + $0xc8] sm:$0xff]
    %v236 = vld [vmem:[#allocation4 + $0xd0] sm:$0xff]
    %v237 = vld [vmem:[#allocation4 + $0xd8] sm:$0xff]
    %v238 = vld [vmem:[#allocation4 + $0xe0] sm:$0xff]
    %v239 = vld [vmem:[#allocation4 + $0xe8] sm:$0xff]
    %v240 = vld [vmem:[#allocation4 + $0xf0] sm:$0xff]
    %v241 = vld [vmem:[#allocation4 + $0xf8] sm:$0xff]
    %v242 = vld [vmem:[#allocation4 + $0x100] sm:$0xff]
    %v243 = vld [vmem:[#allocation4 + $0x108] sm:$0xff]
    %v244 = vld [vmem:[#allocation4 + $0x110] sm:$0xff]
    %v245 = vld [vmem:[#allocation4 + $0x118] sm:$0xff]
    %v246 = vld [vmem:[#allocation4 + $0x120] sm:$0xff]
    %v247 = vld [vmem:[#allocation4 + $0x128] sm:$0xff]
    %v248 = vld [vmem:[#allocation4 + $0x130] sm:$0xff]
    %v249 = vld [vmem:[#allocation4 + $0x138] sm:$0xff]
    %v250 = vld [vmem:[#allocation4 + $0x140] sm:$0xff]
    %v251 = vld [vmem:[#allocation4 + $0x148] sm:$0xff]
    %v252 = vld [vmem:[#allocation4 + $0x150] sm:$0xff]
    %v253 = vld [vmem:[#allocation4 + $0x158] sm:$0xff]
    %v254 = vld [vmem:[#allocation4 + $0x160] sm:$0xff]
    %v255 = vld [vmem:[#allocation4 + $0x168] sm:$0xff]
    %v256 = vld [vmem:[#allocation4 + $0x170] sm:$0xff]
    %v257 = vld [vmem:[#allocation4 + $0x178] sm:$0xff]
    %v258 = vld [vmem:[#allocation4 + $0x180] sm:$0xff]
    %v259 = vld [vmem:[#allocation4 + $0x188] sm:$0xff]
    %v260 = vld [vmem:[#allocation4 + $0x190] sm:$0xff]
    %v261 = vld [vmem:[#allocation4 + $0x198] sm:$0xff]
    %v262 = vld [vmem:[#allocation4 + $0x1a0] sm:$0xff]
    %v263 = vld [vmem:[#allocation4 + $0x1a8] sm:$0xff]
    %v264 = vld [vmem:[#allocation4 + $0x1b0] sm:$0xff]
    %v265 = vld [vmem:[#allocation4 + $0x1b8] sm:$0xff]
    %v266 = vld [vmem:[#allocation4 + $0x1c0] sm:$0xff]
    %v267 = vld [vmem:[#allocation4 + $0x1c8] sm:$0xff]
    %v268 = vld [vmem:[#allocation4 + $0x1d0] sm:$0xff]
    %v269 = vld [vmem:[#allocation4 + $0x1d8] sm:$0xff]
    %v270 = vld [vmem:[#allocation4 + $0x1e0] sm:$0xff]
    %v271 = vld [vmem:[#allocation4 + $0x1e8] sm:$0xff]
    %v272 = vld [vmem:[#allocation4 + $0x1f0] sm:$0xff]
    %v273 = vld [vmem:[#allocation4 + $0x1f8] sm:$0xff]
    %274 = vmatprep.subr.mxu0 %v241
    %275 = vmatpush1.msra.mxu0 %v240
    %276 = vmatprep.subr.mxu0 %v239
    %277 = vmatpush1.msra.mxu0 %v238
    %278 = vmatprep.subr.mxu0 %v237
    %279 = vmatpush1.msra.mxu0 %v236
    %280 = vmatprep.subr.mxu0 %v235
    %281 = vmatpush1.msra.mxu0 %v234
    %282 = vmatprep.subr.mxu0 %v233
    %283 = vmatpush1.msra.mxu0 %v232
    %284 = vmatprep.subr.mxu0 %v231
    %285 = vmatpush1.msra.mxu0 %v230
    %286 = vmatprep.subr.mxu0 %v229
    %287 = vmatpush1.msra.mxu0 %v228
    %288 = vmatprep.subr.mxu0 %v227
    %289 = vmatpush1.msra.mxu0 %v226
    %290 = vmatprep.subr.mxu0 %v225
    %291 = vmatpush1.msra.mxu0 %v224
    %292 = vmatprep.subr.mxu0 %v223
    %293 = vmatpush1.msra.mxu0 %v222
    %294 = vmatprep.subr.mxu0 %v221
    %295 = vmatpush1.msra.mxu0 %v220
    %296 = vmatprep.subr.mxu0 %v219
    %297 = vmatpush1.msra.mxu0 %v218
    %298 = vmatprep.subr.mxu0 %v217
    %299 = vmatpush1.msra.mxu0 %v216
    %300 = vmatprep.subr.mxu0 %v215
    %301 = vmatpush1.msra.mxu0 %v214
    %302 = vmatprep.subr.mxu0 %v213
    %303 = vmatpush1.msra.mxu0 %v212
    %304 = vmatprep.subr.mxu0 %v211
    %305 = vmatpush1.msra.mxu0 %v210
    %306 = vmatprep.subr.mxu0 %v273
    %307 = vmatpush2.msra.mxu0 %v272
    %308 = vmatprep.subr.mxu0 %v271
    %309 = vmatpush2.msra.mxu0 %v270
    %310 = vmatprep.subr.mxu0 %v269
    %311 = vmatpush2.msra.mxu0 %v268
    %312 = vmatprep.subr.mxu0 %v267
    %313 = vmatpush2.msra.mxu0 %v266
    %314 = vmatprep.subr.mxu0 %v265
    %315 = vmatpush2.msra.mxu0 %v264
    %316 = vmatprep.subr.mxu0 %v263
    %317 = vmatpush2.msra.mxu0 %v262
    %318 = vmatprep.subr.mxu0 %v261
    %319 = vmatpush2.msra.mxu0 %v260
    %320 = vmatprep.subr.mxu0 %v259
    %321 = vmatpush2.msra.mxu0 %v258
    %322 = vmatprep.subr.mxu0 %v257
    %323 = vmatpush2.msra.mxu0 %v256
    %324 = vmatprep.subr.mxu0 %v255
    %325 = vmatpush2.msra.mxu0 %v254
    %326 = vmatprep.subr.mxu0 %v253
    %327 = vmatpush2.msra.mxu0 %v252
    %328 = vmatprep.subr.mxu0 %v251
    %329 = vmatpush2.msra.mxu0 %v250
    %330 = vmatprep.subr.mxu0 %v249
    %331 = vmatpush2.msra.mxu0 %v248
    %332 = vmatprep.subr.mxu0 %v247
    %333 = vmatpush2.msra.mxu0 %v246
    %334 = vmatprep.subr.mxu0 %v245
    %335 = vmatpush2.msra.mxu0 %v244
    %336 = vmatprep.subr.mxu0 %v243
    %337 = vmatpush2.msra.mxu0 %v242
    %338 = vmatprep.mubr.f32.mxu0 %v129
    %339 = vmatmul.mubr.f32.gmra.mxu0 %v128
    %v340 = vpop.f32.mrf.mxu0
    %v341 = vadd.f32 0.0, %v340
    %v342 = vpop.f32.mrf.mxu0
    %v343 = vadd.f32 0.0, %v342
    %344 = vmatprep.mubr.f32.mxu0 %v131
    %345 = vmatmul.mubr.f32.gmra.mxu0 %v130
    %v346 = vpop.f32.mrf.mxu0
    %v347 = vadd.f32 0.0, %v346
    %v348 = vpop.f32.mrf.mxu0
    %v349 = vadd.f32 0.0, %v348
    %350 = vdwg.mxu0
    %351 = vmatprep.subr.mxu0 %v177
    %352 = vmatpush1.msra.mxu0 %v176
    %353 = vmatprep.subr.mxu0 %v175
    %354 = vmatpush1.msra.mxu0 %v174
    %355 = vmatprep.subr.mxu0 %v173
    %356 = vmatpush1.msra.mxu0 %v172
    %357 = vmatprep.subr.mxu0 %v171
    %358 = vmatpush1.msra.mxu0 %v170
    %359 = vmatprep.subr.mxu0 %v169
    %360 = vmatpush1.msra.mxu0 %v168
    %361 = vmatprep.subr.mxu0 %v167
    %362 = vmatpush1.msra.mxu0 %v166
    %363 = vmatprep.subr.mxu0 %v165
    %364 = vmatpush1.msra.mxu0 %v164
    %365 = vmatprep.subr.mxu0 %v163
    %366 = vmatpush1.msra.mxu0 %v162
    %367 = vmatprep.subr.mxu0 %v161
    %368 = vmatpush1.msra.mxu0 %v160
    %369 = vmatprep.subr.mxu0 %v159
    %370 = vmatpush1.msra.mxu0 %v158
    %371 = vmatprep.subr.mxu0 %v157
    %372 = vmatpush1.msra.mxu0 %v156
    %373 = vmatprep.subr.mxu0 %v155
    %374 = vmatpush1.msra.mxu0 %v154
    %375 = vmatprep.subr.mxu0 %v153
    %376 = vmatpush1.msra.mxu0 %v152
    %377 = vmatprep.subr.mxu0 %v151
    %378 = vmatpush1.msra.mxu0 %v150
    %379 = vmatprep.subr.mxu0 %v149
    %380 = vmatpush1.msra.mxu0 %v148
    %381 = vmatprep.subr.mxu0 %v147
    %382 = vmatpush1.msra.mxu0 %v146
    %383 = vmatprep.subr.mxu0 %v209
    %384 = vmatpush2.msra.mxu0 %v208
    %385 = vmatprep.subr.mxu0 %v207
    %386 = vmatpush2.msra.mxu0 %v206
    %387 = vmatprep.subr.mxu0 %v205
    %388 = vmatpush2.msra.mxu0 %v204
    %389 = vmatprep.subr.mxu0 %v203
    %390 = vmatpush2.msra.mxu0 %v202
    %391 = vmatprep.subr.mxu0 %v201
    %392 = vmatpush2.msra.mxu0 %v200
    %393 = vmatprep.subr.mxu0 %v199
    %394 = vmatpush2.msra.mxu0 %v198
    %395 = vmatprep.subr.mxu0 %v197
    %396 = vmatpush2.msra.mxu0 %v196
    %397 = vmatprep.subr.mxu0 %v195
    %398 = vmatpush2.msra.mxu0 %v194
    %399 = vmatprep.subr.mxu0 %v193
    %400 = vmatpush2.msra.mxu0 %v192
    %401 = vmatprep.subr.mxu0 %v191
    %402 = vmatpush2.msra.mxu0 %v190
    %403 = vmatprep.subr.mxu0 %v189
    %404 = vmatpush2.msra.mxu0 %v188
    %405 = vmatprep.subr.mxu0 %v187
    %406 = vmatpush2.msra.mxu0 %v186
    %407 = vmatprep.subr.mxu0 %v185
    %408 = vmatpush2.msra.mxu0 %v184
    %409 = vmatprep.subr.mxu0 %v183
    %410 = vmatpush2.msra.mxu0 %v182
    %411 = vmatprep.subr.mxu0 %v181
    %412 = vmatpush2.msra.mxu0 %v180
    %413 = vmatprep.subr.mxu0 %v179
    %414 = vmatpush2.msra.mxu0 %v178
    %415 = vmatprep.mubr.f32.mxu0 %v116
    %416 = vmatmul.mubr.f32.gmra.mxu0 %v115
    %v417 = vpop.f32.mrf.mxu0
    %v418 = vadd.f32 %v341, %v417
    %v419 = vpop.f32.mrf.mxu0
    %v420 = vadd.f32 %v343, %v419
    %421 = vmatprep.mubr.f32.mxu0 %v118
    %422 = vmatmul.mubr.f32.gmra.mxu0 %v117
    %v423 = vpop.f32.mrf.mxu0
    %v424 = vadd.f32 %v347, %v423
    %v425 = vpop.f32.mrf.mxu0
    %v426 = vadd.f32 %v349, %v425
    %427 = vdwg.mxu0
    %s428 = scalar_lea.vmem [#allocation4], 1024
    %v429 = vld [vmem:[%s428] sm:$0xff]
    %v430 = vld [vmem:[%s428 + $0x8] sm:$0xff]
    %v431 = vld [vmem:[%s428 + $0x10] sm:$0xff]
    %v432 = vld [vmem:[%s428 + $0x18] sm:$0xff]
    %v433 = vld [vmem:[%s428 + $0x20] sm:$0xff]
    %v434 = vld [vmem:[%s428 + $0x28] sm:$0xff]
    %v435 = vld [vmem:[%s428 + $0x30] sm:$0xff]
    %v436 = vld [vmem:[%s428 + $0x38] sm:$0xff]
    %v437 = vld [vmem:[%s428 + $0x40] sm:$0xff]
    %v438 = vld [vmem:[%s428 + $0x48] sm:$0xff]
    %v439 = vld [vmem:[%s428 + $0x50] sm:$0xff]
    %v440 = vld [vmem:[%s428 + $0x58] sm:$0xff]
    %v441 = vld [vmem:[%s428 + $0x60] sm:$0xff]
    %v442 = vld [vmem:[%s428 + $0x68] sm:$0xff]
    %v443 = vld [vmem:[%s428 + $0x70] sm:$0xff]
    %v444 = vld [vmem:[%s428 + $0x78] sm:$0xff]
    %v445 = vld [vmem:[%s428 + $0x80] sm:$0xff]
    %v446 = vld [vmem:[%s428 + $0x88] sm:$0xff]
    %v447 = vld [vmem:[%s428 + $0x90] sm:$0xff]
    %v448 = vld [vmem:[%s428 + $0x98] sm:$0xff]
    %v449 = vld [vmem:[%s428 + $0xa0] sm:$0xff]
    %v450 = vld [vmem:[%s428 + $0xa8] sm:$0xff]
    %v451 = vld [vmem:[%s428 + $0xb0] sm:$0xff]
    %v452 = vld [vmem:[%s428 + $0xb8] sm:$0xff]
    %v453 = vld [vmem:[%s428 + $0xc0] sm:$0xff]
    %v454 = vld [vmem:[%s428 + $0xc8] sm:$0xff]
    %v455 = vld [vmem:[%s428 + $0xd0] sm:$0xff]
    %v456 = vld [vmem:[%s428 + $0xd8] sm:$0xff]
    %v457 = vld [vmem:[%s428 + $0xe0] sm:$0xff]
    %v458 = vld [vmem:[%s428 + $0xe8] sm:$0xff]
    %v459 = vld [vmem:[%s428 + $0xf0] sm:$0xff]
    %v460 = vld [vmem:[%s428 + $0xf8] sm:$0xff]
    %v461 = vld [vmem:[%s428 + $0x100] sm:$0xff]
    %v462 = vld [vmem:[%s428 + $0x108] sm:$0xff]
    %v463 = vld [vmem:[%s428 + $0x110] sm:$0xff]
    %v464 = vld [vmem:[%s428 + $0x118] sm:$0xff]
    %v465 = vld [vmem:[%s428 + $0x120] sm:$0xff]
    %v466 = vld [vmem:[%s428 + $0x128] sm:$0xff]
    %v467 = vld [vmem:[%s428 + $0x130] sm:$0xff]
    %v468 = vld [vmem:[%s428 + $0x138] sm:$0xff]
    %v469 = vld [vmem:[%s428 + $0x140] sm:$0xff]
    %v470 = vld [vmem:[%s428 + $0x148] sm:$0xff]
    %v471 = vld [vmem:[%s428 + $0x150] sm:$0xff]
    %v472 = vld [vmem:[%s428 + $0x158] sm:$0xff]
    %v473 = vld [vmem:[%s428 + $0x160] sm:$0xff]
    %v474 = vld [vmem:[%s428 + $0x168] sm:$0xff]
    %v475 = vld [vmem:[%s428 + $0x170] sm:$0xff]
    %v476 = vld [vmem:[%s428 + $0x178] sm:$0xff]
    %v477 = vld [vmem:[%s428 + $0x180] sm:$0xff]
    %v478 = vld [vmem:[%s428 + $0x188] sm:$0xff]
    %v479 = vld [vmem:[%s428 + $0x190] sm:$0xff]
    %v480 = vld [vmem:[%s428 + $0x198] sm:$0xff]
    %v481 = vld [vmem:[%s428 + $0x1a0] sm:$0xff]
    %v482 = vld [vmem:[%s428 + $0x1a8] sm:$0xff]
    %v483 = vld [vmem:[%s428 + $0x1b0] sm:$0xff]
    %v484 = vld [vmem:[%s428 + $0x1b8] sm:$0xff]
    %v485 = vld [vmem:[%s428 + $0x1c0] sm:$0xff]
    %v486 = vld [vmem:[%s428 + $0x1c8] sm:$0xff]
    %v487 = vld [vmem:[%s428 + $0x1d0] sm:$0xff]
    %v488 = vld [vmem:[%s428 + $0x1d8] sm:$0xff]
    %v489 = vld [vmem:[%s428 + $0x1e0] sm:$0xff]
    %v490 = vld [vmem:[%s428 + $0x1e8] sm:$0xff]
    %v491 = vld [vmem:[%s428 + $0x1f0] sm:$0xff]
    %v492 = vld [vmem:[%s428 + $0x1f8] sm:$0xff]
    %493 = vmatprep.subr.mxu0 %v460
    %494 = vmatpush1.msra.mxu0 %v459
    %495 = vmatprep.subr.mxu0 %v458
    %496 = vmatpush1.msra.mxu0 %v457
    %497 = vmatprep.subr.mxu0 %v456
    %498 = vmatpush1.msra.mxu0 %v455
    %499 = vmatprep.subr.mxu0 %v454
    %500 = vmatpush1.msra.mxu0 %v453
    %501 = vmatprep.subr.mxu0 %v452
    %502 = vmatpush1.msra.mxu0 %v451
    %503 = vmatprep.subr.mxu0 %v450
    %504 = vmatpush1.msra.mxu0 %v449
    %505 = vmatprep.subr.mxu0 %v448
    %506 = vmatpush1.msra.mxu0 %v447
    %507 = vmatprep.subr.mxu0 %v446
    %508 = vmatpush1.msra.mxu0 %v445
    %509 = vmatprep.subr.mxu0 %v444
    %510 = vmatpush1.msra.mxu0 %v443
    %511 = vmatprep.subr.mxu0 %v442
    %512 = vmatpush1.msra.mxu0 %v441
    %513 = vmatprep.subr.mxu0 %v440
    %514 = vmatpush1.msra.mxu0 %v439
    %515 = vmatprep.subr.mxu0 %v438
    %516 = vmatpush1.msra.mxu0 %v437
    %517 = vmatprep.subr.mxu0 %v436
    %518 = vmatpush1.msra.mxu0 %v435
    %519 = vmatprep.subr.mxu0 %v434
    %520 = vmatpush1.msra.mxu0 %v433
    %521 = vmatprep.subr.mxu0 %v432
    %522 = vmatpush1.msra.mxu0 %v431
    %523 = vmatprep.subr.mxu0 %v430
    %524 = vmatpush1.msra.mxu0 %v429
    %525 = vmatprep.subr.mxu0 %v492
    %526 = vmatpush2.msra.mxu0 %v491
    %527 = vmatprep.subr.mxu0 %v490
    %528 = vmatpush2.msra.mxu0 %v489
    %529 = vmatprep.subr.mxu0 %v488
    %530 = vmatpush2.msra.mxu0 %v487
    %531 = vmatprep.subr.mxu0 %v486
    %532 = vmatpush2.msra.mxu0 %v485
    %533 = vmatprep.subr.mxu0 %v484
    %534 = vmatpush2.msra.mxu0 %v483
    %535 = vmatprep.subr.mxu0 %v482
    %536 = vmatpush2.msra.mxu0 %v481
    %537 = vmatprep.subr.mxu0 %v480
    %538 = vmatpush2.msra.mxu0 %v479
    %539 = vmatprep.subr.mxu0 %v478
    %540 = vmatpush2.msra.mxu0 %v477
    %541 = vmatprep.subr.mxu0 %v476
    %542 = vmatpush2.msra.mxu0 %v475
    %543 = vmatprep.subr.mxu0 %v474
    %544 = vmatpush2.msra.mxu0 %v473
    %545 = vmatprep.subr.mxu0 %v472
    %546 = vmatpush2.msra.mxu0 %v471
    %547 = vmatprep.subr.mxu0 %v470
    %548 = vmatpush2.msra.mxu0 %v469
    %549 = vmatprep.subr.mxu0 %v468
    %550 = vmatpush2.msra.mxu0 %v467
    %551 = vmatprep.subr.mxu0 %v466
    %552 = vmatpush2.msra.mxu0 %v465
    %553 = vmatprep.subr.mxu0 %v464
    %554 = vmatpush2.msra.mxu0 %v463
    %555 = vmatprep.subr.mxu0 %v462
    %556 = vmatpush2.msra.mxu0 %v461
    %557 = vmatprep.mubr.f32.mxu0 %v142
    %558 = vmatmul.mubr.f32.gmra.mxu0 %v141
    %v559 = vpop.f32.mrf.mxu0
    %v560 = vadd.f32 0.0, %v559
    %v561 = vpop.f32.mrf.mxu0
    %v562 = vadd.f32 0.0, %v561
    %563 = vmatprep.mubr.f32.mxu0 %v144
    %564 = vmatmul.mubr.f32.gmra.mxu0 %v143
    %v565 = vpop.f32.mrf.mxu0
    %v566 = vadd.f32 0.0, %v565
    %v567 = vpop.f32.mrf.mxu0
    %v568 = vadd.f32 0.0, %v567
    %569 = vdwg.mxu0
    %v570 = vadd.f32 %v418, %v560
    %v571 = vadd.f32 %v420, %v562
    %v572 = vadd.f32 %v424, %v566
    %v573 = vadd.f32 %v426, %v568
    %v574 = vld [vmem:[#allocation6] sm:$0x3]
    %v576 = vlaneseq
    %v577 = vshrl.u32 %v576, 7
    %v578 = vsub.s32 0, %v577
    %v579 = vrot.slane %v574, %v578
    %v580 = vlaneseq
    %v581 = vshrl.u32 %v580, 7
    %v582 = vsub.s32 1, %v581
    %v583 = vrot.slane %v574, %v582
    %v586 = vadd.f32 %v570, %v579
    %v587 = vadd.f32 %v571, %v583
    %v588 = vadd.f32 %v572, %v579
    %v589 = vadd.f32 %v573, %v583
    %v590 = vmax.f32 %v586, 0.0
    %v591 = vmax.f32 %v587, 0.0
    %v592 = vmax.f32 %v588, 0.0
    %v593 = vmax.f32 %v589, 0.0
    %v594 = vrot.slane %v590, 7
    %v595 = vrot.slane %v591, 7
    %v596 = vrot.slane %v592, 7
    %v597 = vrot.slane %v593, 7
    %v598 = vsel %vm123, %v594, %v596
    %v599 = vsel %vm123, %v595, %v597
    %v600 = vsel %vm123, %v596, %v594
    %v601 = vsel %vm123, %v597, %v595
    %v602 = vmul.f32 %v107, %v600
    %v603 = vmul.f32 %v107, %v601
    %v604 = vmul.f32 %v108, %v598
    %v605 = vmul.f32 %v108, %v599
    %v606 = vrot.slane %v590, 1
    %v607 = vrot.slane %v591, 1
    %v608 = vrot.slane %v592, 1
    %v609 = vrot.slane %v593, 1
    %v610 = vsel %vm136, %v606, %v608
    %v611 = vsel %vm136, %v607, %v609
    %v612 = vsel %vm136, %v608, %v606
    %v613 = vsel %vm136, %v609, %v607
    %v614 = vmul.f32 %v113, %v610
    %v615 = vmul.f32 %v113, %v611
    %v616 = vmul.f32 %v114, %v612
    %v617 = vmul.f32 %v114, %v613
    %s618 = scalar_lea.vmem [#allocation4], 2048
    %v619 = vld [vmem:[%s618] sm:$0xff]
    %v620 = vld [vmem:[%s618 + $0x8] sm:$0xff]
    %v621 = vld [vmem:[%s618 + $0x10] sm:$0xff]
    %v622 = vld [vmem:[%s618 + $0x18] sm:$0xff]
    %v623 = vld [vmem:[%s618 + $0x20] sm:$0xff]
    %v624 = vld [vmem:[%s618 + $0x28] sm:$0xff]
    %v625 = vld [vmem:[%s618 + $0x30] sm:$0xff]
    %v626 = vld [vmem:[%s618 + $0x38] sm:$0xff]
    %v627 = vld [vmem:[%s618 + $0x40] sm:$0xff]
    %v628 = vld [vmem:[%s618 + $0x48] sm:$0xff]
    %v629 = vld [vmem:[%s618 + $0x50] sm:$0xff]
    %v630 = vld [vmem:[%s618 + $0x58] sm:$0xff]
    %v631 = vld [vmem:[%s618 + $0x60] sm:$0xff]
    %v632 = vld [vmem:[%s618 + $0x68] sm:$0xff]
    %v633 = vld [vmem:[%s618 + $0x70] sm:$0xff]
    %v634 = vld [vmem:[%s618 + $0x78] sm:$0xff]
    %v635 = vld [vmem:[%s618 + $0x80] sm:$0xff]
    %v636 = vld [vmem:[%s618 + $0x88] sm:$0xff]
    %v637 = vld [vmem:[%s618 + $0x90] sm:$0xff]
    %v638 = vld [vmem:[%s618 + $0x98] sm:$0xff]
    %v639 = vld [vmem:[%s618 + $0xa0] sm:$0xff]
    %v640 = vld [vmem:[%s618 + $0xa8] sm:$0xff]
    %v641 = vld [vmem:[%s618 + $0xb0] sm:$0xff]
    %v642 = vld [vmem:[%s618 + $0xb8] sm:$0xff]
    %v643 = vld [vmem:[%s618 + $0xc0] sm:$0xff]
    %v644 = vld [vmem:[%s618 + $0xc8] sm:$0xff]
    %v645 = vld [vmem:[%s618 + $0xd0] sm:$0xff]
    %v646 = vld [vmem:[%s618 + $0xd8] sm:$0xff]
    %v647 = vld [vmem:[%s618 + $0xe0] sm:$0xff]
    %v648 = vld [vmem:[%s618 + $0xe8] sm:$0xff]
    %v649 = vld [vmem:[%s618 + $0xf0] sm:$0xff]
    %v650 = vld [vmem:[%s618 + $0xf8] sm:$0xff]
    %v651 = vld [vmem:[%s618 + $0x100] sm:$0xff]
    %v652 = vld [vmem:[%s618 + $0x108] sm:$0xff]
    %v653 = vld [vmem:[%s618 + $0x110] sm:$0xff]
    %v654 = vld [vmem:[%s618 + $0x118] sm:$0xff]
    %v655 = vld [vmem:[%s618 + $0x120] sm:$0xff]
    %v656 = vld [vmem:[%s618 + $0x128] sm:$0xff]
    %v657 = vld [vmem:[%s618 + $0x130] sm:$0xff]
    %v658 = vld [vmem:[%s618 + $0x138] sm:$0xff]
    %v659 = vld [vmem:[%s618 + $0x140] sm:$0xff]
    %v660 = vld [vmem:[%s618 + $0x148] sm:$0xff]
    %v661 = vld [vmem:[%s618 + $0x150] sm:$0xff]
    %v662 = vld [vmem:[%s618 + $0x158] sm:$0xff]
    %v663 = vld [vmem:[%s618 + $0x160] sm:$0xff]
    %v664 = vld [vmem:[%s618 + $0x168] sm:$0xff]
    %v665 = vld [vmem:[%s618 + $0x170] sm:$0xff]
    %v666 = vld [vmem:[%s618 + $0x178] sm:$0xff]
    %v667 = vld [vmem:[%s618 + $0x180] sm:$0xff]
    %v668 = vld [vmem:[%s618 + $0x188] sm:$0xff]
    %v669 = vld [vmem:[%s618 + $0x190] sm:$0xff]
    %v670 = vld [vmem:[%s618 + $0x198] sm:$0xff]
    %v671 = vld [vmem:[%s618 + $0x1a0] sm:$0xff]
    %v672 = vld [vmem:[%s618 + $0x1a8] sm:$0xff]
    %v673 = vld [vmem:[%s618 + $0x1b0] sm:$0xff]
    %v674 = vld [vmem:[%s618 + $0x1b8] sm:$0xff]
    %v675 = vld [vmem:[%s618 + $0x1c0] sm:$0xff]
    %v676 = vld [vmem:[%s618 + $0x1c8] sm:$0xff]
    %v677 = vld [vmem:[%s618 + $0x1d0] sm:$0xff]
    %v678 = vld [vmem:[%s618 + $0x1d8] sm:$0xff]
    %v679 = vld [vmem:[%s618 + $0x1e0] sm:$0xff]
    %v680 = vld [vmem:[%s618 + $0x1e8] sm:$0xff]
    %v681 = vld [vmem:[%s618 + $0x1f0] sm:$0xff]
    %v682 = vld [vmem:[%s618 + $0x1f8] sm:$0xff]
    %s683 = scalar_lea.vmem [#allocation4], 1536
    %v684 = vld [vmem:[%s683] sm:$0xff]
    %v685 = vld [vmem:[%s683 + $0x8] sm:$0xff]
    %v686 = vld [vmem:[%s683 + $0x10] sm:$0xff]
    %v687 = vld [vmem:[%s683 + $0x18] sm:$0xff]
    %v688 = vld [vmem:[%s683 + $0x20] sm:$0xff]
    %v689 = vld [vmem:[%s683 + $0x28] sm:$0xff]
    %v690 = vld [vmem:[%s683 + $0x30] sm:$0xff]
    %v691 = vld [vmem:[%s683 + $0x38] sm:$0xff]
    %v692 = vld [vmem:[%s683 + $0x40] sm:$0xff]
    %v693 = vld [vmem:[%s683 + $0x48] sm:$0xff]
    %v694 = vld [vmem:[%s683 + $0x50] sm:$0xff]
    %v695 = vld [vmem:[%s683 + $0x58] sm:$0xff]
    %v696 = vld [vmem:[%s683 + $0x60] sm:$0xff]
    %v697 = vld [vmem:[%s683 + $0x68] sm:$0xff]
    %v698 = vld [vmem:[%s683 + $0x70] sm:$0xff]
    %v699 = vld [vmem:[%s683 + $0x78] sm:$0xff]
    %v700 = vld [vmem:[%s683 + $0x80] sm:$0xff]
    %v701 = vld [vmem:[%s683 + $0x88] sm:$0xff]
    %v702 = vld [vmem:[%s683 + $0x90] sm:$0xff]
    %v703 = vld [vmem:[%s683 + $0x98] sm:$0xff]
    %v704 = vld [vmem:[%s683 + $0xa0] sm:$0xff]
    %v705 = vld [vmem:[%s683 + $0xa8] sm:$0xff]
    %v706 = vld [vmem:[%s683 + $0xb0] sm:$0xff]
    %v707 = vld [vmem:[%s683 + $0xb8] sm:$0xff]
    %v708 = vld [vmem:[%s683 + $0xc0] sm:$0xff]
    %v709 = vld [vmem:[%s683 + $0xc8] sm:$0xff]
    %v710 = vld [vmem:[%s683 + $0xd0] sm:$0xff]
    %v711 = vld [vmem:[%s683 + $0xd8] sm:$0xff]
    %v712 = vld [vmem:[%s683 + $0xe0] sm:$0xff]
    %v713 = vld [vmem:[%s683 + $0xe8] sm:$0xff]
    %v714 = vld [vmem:[%s683 + $0xf0] sm:$0xff]
    %v715 = vld [vmem:[%s683 + $0xf8] sm:$0xff]
    %v716 = vld [vmem:[%s683 + $0x100] sm:$0xff]
    %v717 = vld [vmem:[%s683 + $0x108] sm:$0xff]
    %v718 = vld [vmem:[%s683 + $0x110] sm:$0xff]
    %v719 = vld [vmem:[%s683 + $0x118] sm:$0xff]
    %v720 = vld [vmem:[%s683 + $0x120] sm:$0xff]
    %v721 = vld [vmem:[%s683 + $0x128] sm:$0xff]
    %v722 = vld [vmem:[%s683 + $0x130] sm:$0xff]
    %v723 = vld [vmem:[%s683 + $0x138] sm:$0xff]
    %v724 = vld [vmem:[%s683 + $0x140] sm:$0xff]
    %v725 = vld [vmem:[%s683 + $0x148] sm:$0xff]
    %v726 = vld [vmem:[%s683 + $0x150] sm:$0xff]
    %v727 = vld [vmem:[%s683 + $0x158] sm:$0xff]
    %v728 = vld [vmem:[%s683 + $0x160] sm:$0xff]
    %v729 = vld [vmem:[%s683 + $0x168] sm:$0xff]
    %v730 = vld [vmem:[%s683 + $0x170] sm:$0xff]
    %v731 = vld [vmem:[%s683 + $0x178] sm:$0xff]
    %v732 = vld [vmem:[%s683 + $0x180] sm:$0xff]
    %v733 = vld [vmem:[%s683 + $0x188] sm:$0xff]
    %v734 = vld [vmem:[%s683 + $0x190] sm:$0xff]
    %v735 = vld [vmem:[%s683 + $0x198] sm:$0xff]
    %v736 = vld [vmem:[%s683 + $0x1a0] sm:$0xff]
    %v737 = vld [vmem:[%s683 + $0x1a8] sm:$0xff]
    %v738 = vld [vmem:[%s683 + $0x1b0] sm:$0xff]
    %v739 = vld [vmem:[%s683 + $0x1b8] sm:$0xff]
    %v740 = vld [vmem:[%s683 + $0x1c0] sm:$0xff]
    %v741 = vld [vmem:[%s683 + $0x1c8] sm:$0xff]
    %v742 = vld [vmem:[%s683 + $0x1d0] sm:$0xff]
    %v743 = vld [vmem:[%s683 + $0x1d8] sm:$0xff]
    %v744 = vld [vmem:[%s683 + $0x1e0] sm:$0xff]
    %v745 = vld [vmem:[%s683 + $0x1e8] sm:$0xff]
    %v746 = vld [vmem:[%s683 + $0x1f0] sm:$0xff]
    %v747 = vld [vmem:[%s683 + $0x1f8] sm:$0xff]
    %748 = vmatprep.subr.mxu0 %v715
    %749 = vmatpush1.msra.mxu0 %v714
    %750 = vmatprep.subr.mxu0 %v713
    %751 = vmatpush1.msra.mxu0 %v712
    %752 = vmatprep.subr.mxu0 %v711
    %753 = vmatpush1.msra.mxu0 %v710
    %754 = vmatprep.subr.mxu0 %v709
    %755 = vmatpush1.msra.mxu0 %v708
    %756 = vmatprep.subr.mxu0 %v707
    %757 = vmatpush1.msra.mxu0 %v706
    %758 = vmatprep.subr.mxu0 %v705
    %759 = vmatpush1.msra.mxu0 %v704
    %760 = vmatprep.subr.mxu0 %v703
    %761 = vmatpush1.msra.mxu0 %v702
    %762 = vmatprep.subr.mxu0 %v701
    %763 = vmatpush1.msra.mxu0 %v700
    %764 = vmatprep.subr.mxu0 %v699
    %765 = vmatpush1.msra.mxu0 %v698
    %766 = vmatprep.subr.mxu0 %v697
    %767 = vmatpush1.msra.mxu0 %v696
    %768 = vmatprep.subr.mxu0 %v695
    %769 = vmatpush1.msra.mxu0 %v694
    %770 = vmatprep.subr.mxu0 %v693
    %771 = vmatpush1.msra.mxu0 %v692
    %772 = vmatprep.subr.mxu0 %v691
    %773 = vmatpush1.msra.mxu0 %v690
    %774 = vmatprep.subr.mxu0 %v689
    %775 = vmatpush1.msra.mxu0 %v688
    %776 = vmatprep.subr.mxu0 %v687
    %777 = vmatpush1.msra.mxu0 %v686
    %778 = vmatprep.subr.mxu0 %v685
    %779 = vmatpush1.msra.mxu0 %v684
    %780 = vmatprep.subr.mxu0 %v747
    %781 = vmatpush2.msra.mxu0 %v746
    %782 = vmatprep.subr.mxu0 %v745
    %783 = vmatpush2.msra.mxu0 %v744
    %784 = vmatprep.subr.mxu0 %v743
    %785 = vmatpush2.msra.mxu0 %v742
    %786 = vmatprep.subr.mxu0 %v741
    %787 = vmatpush2.msra.mxu0 %v740
    %788 = vmatprep.subr.mxu0 %v739
    %789 = vmatpush2.msra.mxu0 %v738
    %790 = vmatprep.subr.mxu0 %v737
    %791 = vmatpush2.msra.mxu0 %v736
    %792 = vmatprep.subr.mxu0 %v735
    %793 = vmatpush2.msra.mxu0 %v734
    %794 = vmatprep.subr.mxu0 %v733
    %795 = vmatpush2.msra.mxu0 %v732
    %796 = vmatprep.subr.mxu0 %v731
    %797 = vmatpush2.msra.mxu0 %v730
    %798 = vmatprep.subr.mxu0 %v729
    %799 = vmatpush2.msra.mxu0 %v728
    %800 = vmatprep.subr.mxu0 %v727
    %801 = vmatpush2.msra.mxu0 %v726
    %802 = vmatprep.subr.mxu0 %v725
    %803 = vmatpush2.msra.mxu0 %v724
    %804 = vmatprep.subr.mxu0 %v723
    %805 = vmatpush2.msra.mxu0 %v722
    %806 = vmatprep.subr.mxu0 %v721
    %807 = vmatpush2.msra.mxu0 %v720
    %808 = vmatprep.subr.mxu0 %v719
    %809 = vmatpush2.msra.mxu0 %v718
    %810 = vmatprep.subr.mxu0 %v717
    %811 = vmatpush2.msra.mxu0 %v716
    %812 = vmatprep.mubr.f32.mxu0 %v603
    %813 = vmatmul.mubr.f32.gmra.mxu0 %v602
    %v814 = vpop.f32.mrf.mxu0
    %v815 = vadd.f32 0.0, %v814
    %v816 = vpop.f32.mrf.mxu0
    %v817 = vadd.f32 0.0, %v816
    %818 = vmatprep.mubr.f32.mxu0 %v605
    %819 = vmatmul.mubr.f32.gmra.mxu0 %v604
    %v820 = vpop.f32.mrf.mxu0
    %v821 = vadd.f32 0.0, %v820
    %v822 = vpop.f32.mrf.mxu0
    %v823 = vadd.f32 0.0, %v822
    %824 = vdwg.mxu0
    %825 = vmatprep.subr.mxu0 %v650
    %826 = vmatpush1.msra.mxu0 %v649
    %827 = vmatprep.subr.mxu0 %v648
    %828 = vmatpush1.msra.mxu0 %v647
    %829 = vmatprep.subr.mxu0 %v646
    %830 = vmatpush1.msra.mxu0 %v645
    %831 = vmatprep.subr.mxu0 %v644
    %832 = vmatpush1.msra.mxu0 %v643
    %833 = vmatprep.subr.mxu0 %v642
    %834 = vmatpush1.msra.mxu0 %v641
    %835 = vmatprep.subr.mxu0 %v640
    %836 = vmatpush1.msra.mxu0 %v639
    %837 = vmatprep.subr.mxu0 %v638
    %838 = vmatpush1.msra.mxu0 %v637
    %839 = vmatprep.subr.mxu0 %v636
    %840 = vmatpush1.msra.mxu0 %v635
    %841 = vmatprep.subr.mxu0 %v634
    %842 = vmatpush1.msra.mxu0 %v633
    %843 = vmatprep.subr.mxu0 %v632
    %844 = vmatpush1.msra.mxu0 %v631
    %845 = vmatprep.subr.mxu0 %v630
    %846 = vmatpush1.msra.mxu0 %v629
    %847 = vmatprep.subr.mxu0 %v628
    %848 = vmatpush1.msra.mxu0 %v627
    %849 = vmatprep.subr.mxu0 %v626
    %850 = vmatpush1.msra.mxu0 %v625
    %851 = vmatprep.subr.mxu0 %v624
    %852 = vmatpush1.msra.mxu0 %v623
    %853 = vmatprep.subr.mxu0 %v622
    %854 = vmatpush1.msra.mxu0 %v621
    %855 = vmatprep.subr.mxu0 %v620
    %856 = vmatpush1.msra.mxu0 %v619
    %857 = vmatprep.subr.mxu0 %v682
    %858 = vmatpush2.msra.mxu0 %v681
    %859 = vmatprep.subr.mxu0 %v680
    %860 = vmatpush2.msra.mxu0 %v679
    %861 = vmatprep.subr.mxu0 %v678
    %862 = vmatpush2.msra.mxu0 %v677
    %863 = vmatprep.subr.mxu0 %v676
    %864 = vmatpush2.msra.mxu0 %v675
    %865 = vmatprep.subr.mxu0 %v674
    %866 = vmatpush2.msra.mxu0 %v673
    %867 = vmatprep.subr.mxu0 %v672
    %868 = vmatpush2.msra.mxu0 %v671
    %869 = vmatprep.subr.mxu0 %v670
    %870 = vmatpush2.msra.mxu0 %v669
    %871 = vmatprep.subr.mxu0 %v668
    %872 = vmatpush2.msra.mxu0 %v667
    %873 = vmatprep.subr.mxu0 %v666
    %874 = vmatpush2.msra.mxu0 %v665
    %875 = vmatprep.subr.mxu0 %v664
    %876 = vmatpush2.msra.mxu0 %v663
    %877 = vmatprep.subr.mxu0 %v662
    %878 = vmatpush2.msra.mxu0 %v661
    %879 = vmatprep.subr.mxu0 %v660
    %880 = vmatpush2.msra.mxu0 %v659
    %881 = vmatprep.subr.mxu0 %v658
    %882 = vmatpush2.msra.mxu0 %v657
    %883 = vmatprep.subr.mxu0 %v656
    %884 = vmatpush2.msra.mxu0 %v655
    %885 = vmatprep.subr.mxu0 %v654
    %886 = vmatpush2.msra.mxu0 %v653
    %887 = vmatprep.subr.mxu0 %v652
    %888 = vmatpush2.msra.mxu0 %v651
    %889 = vmatprep.mubr.f32.mxu0 %v591
    %890 = vmatmul.mubr.f32.gmra.mxu0 %v590
    %v891 = vpop.f32.mrf.mxu0
    %v892 = vadd.f32 %v815, %v891
    %v893 = vpop.f32.mrf.mxu0
    %v894 = vadd.f32 %v817, %v893
    %895 = vmatprep.mubr.f32.mxu0 %v593
    %896 = vmatmul.mubr.f32.gmra.mxu0 %v592
    %v897 = vpop.f32.mrf.mxu0
    %v898 = vadd.f32 %v821, %v897
    %v899 = vpop.f32.mrf.mxu0
    %v900 = vadd.f32 %v823, %v899
    %901 = vdwg.mxu0
    %s902 = scalar_lea.vmem [#allocation4], 2560
    %v903 = vld [vmem:[%s902] sm:$0xff]
    %v904 = vld [vmem:[%s902 + $0x8] sm:$0xff]
    %v905 = vld [vmem:[%s902 + $0x10] sm:$0xff]
    %v906 = vld [vmem:[%s902 + $0x18] sm:$0xff]
    %v907 = vld [vmem:[%s902 + $0x20] sm:$0xff]
    %v908 = vld [vmem:[%s902 + $0x28] sm:$0xff]
    %v909 = vld [vmem:[%s902 + $0x30] sm:$0xff]
    %v910 = vld [vmem:[%s902 + $0x38] sm:$0xff]
    %v911 = vld [vmem:[%s902 + $0x40] sm:$0xff]
    %v912 = vld [vmem:[%s902 + $0x48] sm:$0xff]
    %v913 = vld [vmem:[%s902 + $0x50] sm:$0xff]
    %v914 = vld [vmem:[%s902 + $0x58] sm:$0xff]
    %v915 = vld [vmem:[%s902 + $0x60] sm:$0xff]
    %v916 = vld [vmem:[%s902 + $0x68] sm:$0xff]
    %v917 = vld [vmem:[%s902 + $0x70] sm:$0xff]
    %v918 = vld [vmem:[%s902 + $0x78] sm:$0xff]
    %v919 = vld [vmem:[%s902 + $0x80] sm:$0xff]
    %v920 = vld [vmem:[%s902 + $0x88] sm:$0xff]
    %v921 = vld [vmem:[%s902 + $0x90] sm:$0xff]
    %v922 = vld [vmem:[%s902 + $0x98] sm:$0xff]
    %v923 = vld [vmem:[%s902 + $0xa0] sm:$0xff]
    %v924 = vld [vmem:[%s902 + $0xa8] sm:$0xff]
    %v925 = vld [vmem:[%s902 + $0xb0] sm:$0xff]
    %v926 = vld [vmem:[%s902 + $0xb8] sm:$0xff]
    %v927 = vld [vmem:[%s902 + $0xc0] sm:$0xff]
    %v928 = vld [vmem:[%s902 + $0xc8] sm:$0xff]
    %v929 = vld [vmem:[%s902 + $0xd0] sm:$0xff]
    %v930 = vld [vmem:[%s902 + $0xd8] sm:$0xff]
    %v931 = vld [vmem:[%s902 + $0xe0] sm:$0xff]
    %v932 = vld [vmem:[%s902 + $0xe8] sm:$0xff]
    %v933 = vld [vmem:[%s902 + $0xf0] sm:$0xff]
    %v934 = vld [vmem:[%s902 + $0xf8] sm:$0xff]
    %v935 = vld [vmem:[%s902 + $0x100] sm:$0xff]
    %v936 = vld [vmem:[%s902 + $0x108] sm:$0xff]
    %v937 = vld [vmem:[%s902 + $0x110] sm:$0xff]
    %v938 = vld [vmem:[%s902 + $0x118] sm:$0xff]
    %v939 = vld [vmem:[%s902 + $0x120] sm:$0xff]
    %v940 = vld [vmem:[%s902 + $0x128] sm:$0xff]
    %v941 = vld [vmem:[%s902 + $0x130] sm:$0xff]
    %v942 = vld [vmem:[%s902 + $0x138] sm:$0xff]
    %v943 = vld [vmem:[%s902 + $0x140] sm:$0xff]
    %v944 = vld [vmem:[%s902 + $0x148] sm:$0xff]
    %v945 = vld [vmem:[%s902 + $0x150] sm:$0xff]
    %v946 = vld [vmem:[%s902 + $0x158] sm:$0xff]
    %v947 = vld [vmem:[%s902 + $0x160] sm:$0xff]
    %v948 = vld [vmem:[%s902 + $0x168] sm:$0xff]
    %v949 = vld [vmem:[%s902 + $0x170] sm:$0xff]
    %v950 = vld [vmem:[%s902 + $0x178] sm:$0xff]
    %v951 = vld [vmem:[%s902 + $0x180] sm:$0xff]
    %v952 = vld [vmem:[%s902 + $0x188] sm:$0xff]
    %v953 = vld [vmem:[%s902 + $0x190] sm:$0xff]
    %v954 = vld [vmem:[%s902 + $0x198] sm:$0xff]
    %v955 = vld [vmem:[%s902 + $0x1a0] sm:$0xff]
    %v956 = vld [vmem:[%s902 + $0x1a8] sm:$0xff]
    %v957 = vld [vmem:[%s902 + $0x1b0] sm:$0xff]
    %v958 = vld [vmem:[%s902 + $0x1b8] sm:$0xff]
    %v959 = vld [vmem:[%s902 + $0x1c0] sm:$0xff]
    %v960 = vld [vmem:[%s902 + $0x1c8] sm:$0xff]
    %v961 = vld [vmem:[%s902 + $0x1d0] sm:$0xff]
    %v962 = vld [vmem:[%s902 + $0x1d8] sm:$0xff]
    %v963 = vld [vmem:[%s902 + $0x1e0] sm:$0xff]
    %v964 = vld [vmem:[%s902 + $0x1e8] sm:$0xff]
    %v965 = vld [vmem:[%s902 + $0x1f0] sm:$0xff]
    %v966 = vld [vmem:[%s902 + $0x1f8] sm:$0xff]
    %967 = vmatprep.subr.mxu0 %v934
    %968 = vmatpush1.msra.mxu0 %v933
    %969 = vmatprep.subr.mxu0 %v932
    %970 = vmatpush1.msra.mxu0 %v931
    %971 = vmatprep.subr.mxu0 %v930
    %972 = vmatpush1.msra.mxu0 %v929
    %973 = vmatprep.subr.mxu0 %v928
    %974 = vmatpush1.msra.mxu0 %v927
    %975 = vmatprep.subr.mxu0 %v926
    %976 = vmatpush1.msra.mxu0 %v925
    %977 = vmatprep.subr.mxu0 %v924
    %978 = vmatpush1.msra.mxu0 %v923
    %979 = vmatprep.subr.mxu0 %v922
    %980 = vmatpush1.msra.mxu0 %v921
    %981 = vmatprep.subr.mxu0 %v920
    %982 = vmatpush1.msra.mxu0 %v919
    %983 = vmatprep.subr.mxu0 %v918
    %984 = vmatpush1.msra.mxu0 %v917
    %985 = vmatprep.subr.mxu0 %v916
    %986 = vmatpush1.msra.mxu0 %v915
    %987 = vmatprep.subr.mxu0 %v914
    %988 = vmatpush1.msra.mxu0 %v913
    %989 = vmatprep.subr.mxu0 %v912
    %990 = vmatpush1.msra.mxu0 %v911
    %991 = vmatprep.subr.mxu0 %v910
    %992 = vmatpush1.msra.mxu0 %v909
    %993 = vmatprep.subr.mxu0 %v908
    %994 = vmatpush1.msra.mxu0 %v907
    %995 = vmatprep.subr.mxu0 %v906
    %996 = vmatpush1.msra.mxu0 %v905
    %997 = vmatprep.subr.mxu0 %v904
    %998 = vmatpush1.msra.mxu0 %v903
    %999 = vmatprep.subr.mxu0 %v966
    %1000 = vmatpush2.msra.mxu0 %v965
    %1001 = vmatprep.subr.mxu0 %v964
    %1002 = vmatpush2.msra.mxu0 %v963
    %1003 = vmatprep.subr.mxu0 %v962
    %1004 = vmatpush2.msra.mxu0 %v961
    %1005 = vmatprep.subr.mxu0 %v960
    %1006 = vmatpush2.msra.mxu0 %v959
    %1007 = vmatprep.subr.mxu0 %v958
    %1008 = vmatpush2.msra.mxu0 %v957
    %1009 = vmatprep.subr.mxu0 %v956
    %1010 = vmatpush2.msra.mxu0 %v955
    %1011 = vmatprep.subr.mxu0 %v954
    %1012 = vmatpush2.msra.mxu0 %v953
    %1013 = vmatprep.subr.mxu0 %v952
    %1014 = vmatpush2.msra.mxu0 %v951
    %1015 = vmatprep.subr.mxu0 %v950
    %1016 = vmatpush2.msra.mxu0 %v949
    %1017 = vmatprep.subr.mxu0 %v948
    %1018 = vmatpush2.msra.mxu0 %v947
    %1019 = vmatprep.subr.mxu0 %v946
    %1020 = vmatpush2.msra.mxu0 %v945
    %1021 = vmatprep.subr.mxu0 %v944
    %1022 = vmatpush2.msra.mxu0 %v943
    %1023 = vmatprep.subr.mxu0 %v942
    %1024 = vmatpush2.msra.mxu0 %v941
    %1025 = vmatprep.subr.mxu0 %v940
    %1026 = vmatpush2.msra.mxu0 %v939
    %1027 = vmatprep.subr.mxu0 %v938
    %1028 = vmatpush2.msra.mxu0 %v937
    %1029 = vmatprep.subr.mxu0 %v936
    %1030 = vmatpush2.msra.mxu0 %v935
    %1031 = vmatprep.mubr.f32.mxu0 %v615
    %1032 = vmatmul.mubr.f32.gmra.mxu0 %v614
    %v1033 = vpop.f32.mrf.mxu0
    %v1034 = vadd.f32 0.0, %v1033
    %v1035 = vpop.f32.mrf.mxu0
    %v1036 = vadd.f32 0.0, %v1035
    %1037 = vmatprep.mubr.f32.mxu0 %v617
    %1038 = vmatmul.mubr.f32.gmra.mxu0 %v616
    %v1039 = vpop.f32.mrf.mxu0
    %v1040 = vadd.f32 0.0, %v1039
    %v1041 = vpop.f32.mrf.mxu0
    %v1042 = vadd.f32 0.0, %v1041
    %1043 = vdwg.mxu0
    %v1044 = vadd.f32 %v892, %v1034
    %v1045 = vadd.f32 %v894, %v1036
    %v1046 = vadd.f32 %v898, %v1040
    %v1047 = vadd.f32 %v900, %v1042
    %s1048 = scalar_lea.vmem [#allocation6], 2
    %v1049 = vld [vmem:[%s1048] sm:$0x3]
    %v1051 = vlaneseq
    %v1052 = vshrl.u32 %v1051, 7
    %v1053 = vsub.s32 0, %v1052
    %v1054 = vrot.slane %v1049, %v1053
    %v1055 = vlaneseq
    %v1056 = vshrl.u32 %v1055, 7
    %v1057 = vsub.s32 1, %v1056
    %v1058 = vrot.slane %v1049, %v1057
    %v1061 = vadd.f32 %v1044, %v1054
    %v1062 = vadd.f32 %v1045, %v1058
    %v1063 = vadd.f32 %v1046, %v1054
    %v1064 = vadd.f32 %v1047, %v1058
    %v1065 = vadd.f32 %v1061, %v115
    %v1066 = vadd.f32 %v1062, %v116
    %v1067 = vadd.f32 %v1063, %v117
    %v1068 = vadd.f32 %v1064, %v118
    %v1069 = vmax.f32 %v1065, 0.0
    %v1070 = vmax.f32 %v1066, 0.0
    %v1071 = vmax.f32 %v1067, 0.0
    %v1072 = vmax.f32 %v1068, 0.0
    %v1073 = vrot.slane %v1069, 7
    %v1074 = vrot.slane %v1070, 7
    %v1075 = vrot.slane %v1071, 7
    %v1076 = vrot.slane %v1072, 7
    %v1077 = vsel %vm123, %v1073, %v1075
    %v1078 = vsel %vm123, %v1074, %v1076
    %v1079 = vsel %vm123, %v1075, %v1073
    %v1080 = vsel %vm123, %v1076, %v1074
    %v1081 = vmul.f32 %v107, %v1079
    %v1082 = vmul.f32 %v107, %v1080
    %v1083 = vmul.f32 %v108, %v1077
    %v1084 = vmul.f32 %v108, %v1078
    %v1085 = vrot.slane %v1069, 1
    %v1086 = vrot.slane %v1070, 1
    %v1087 = vrot.slane %v1071, 1
    %v1088 = vrot.slane %v1072, 1
    %v1089 = vsel %vm136, %v1085, %v1087
    %v1090 = vsel %vm136, %v1086, %v1088
    %v1091 = vsel %vm136, %v1087, %v1085
    %v1092 = vsel %vm136, %v1088, %v1086
    %v1093 = vmul.f32 %v113, %v1089
    %v1094 = vmul.f32 %v113, %v1090
    %v1095 = vmul.f32 %v114, %v1091
    %v1096 = vmul.f32 %v114, %v1092
    %s1097 = scalar_lea.vmem [#allocation4], 3584
    %v1098 = vld [vmem:[%s1097] sm:$0xff]
    %v1099 = vld [vmem:[%s1097 + $0x8] sm:$0xff]
    %v1100 = vld [vmem:[%s1097 + $0x10] sm:$0xff]
    %v1101 = vld [vmem:[%s1097 + $0x18] sm:$0xff]
    %v1102 = vld [vmem:[%s1097 + $0x20] sm:$0xff]
    %v1103 = vld [vmem:[%s1097 + $0x28] sm:$0xff]
    %v1104 = vld [vmem:[%s1097 + $0x30] sm:$0xff]
    %v1105 = vld [vmem:[%s1097 + $0x38] sm:$0xff]
    %v1106 = vld [vmem:[%s1097 + $0x40] sm:$0xff]
    %v1107 = vld [vmem:[%s1097 + $0x48] sm:$0xff]
    %v1108 = vld [vmem:[%s1097 + $0x50] sm:$0xff]
    %v1109 = vld [vmem:[%s1097 + $0x58] sm:$0xff]
    %v1110 = vld [vmem:[%s1097 + $0x60] sm:$0xff]
    %v1111 = vld [vmem:[%s1097 + $0x68] sm:$0xff]
    %v1112 = vld [vmem:[%s1097 + $0x70] sm:$0xff]
    %v1113 = vld [vmem:[%s1097 + $0x78] sm:$0xff]
    %v1114 = vld [vmem:[%s1097 + $0x80] sm:$0xff]
    %v1115 = vld [vmem:[%s1097 + $0x88] sm:$0xff]
    %v1116 = vld [vmem:[%s1097 + $0x90] sm:$0xff]
    %v1117 = vld [vmem:[%s1097 + $0x98] sm:$0xff]
    %v1118 = vld [vmem:[%s1097 + $0xa0] sm:$0xff]
    %v1119 = vld [vmem:[%s1097 + $0xa8] sm:$0xff]
    %v1120 = vld [vmem:[%s1097 + $0xb0] sm:$0xff]
    %v1121 = vld [vmem:[%s1097 + $0xb8] sm:$0xff]
    %v1122 = vld [vmem:[%s1097 + $0xc0] sm:$0xff]
    %v1123 = vld [vmem:[%s1097 + $0xc8] sm:$0xff]
    %v1124 = vld [vmem:[%s1097 + $0xd0] sm:$0xff]
    %v1125 = vld [vmem:[%s1097 + $0xd8] sm:$0xff]
    %v1126 = vld [vmem:[%s1097 + $0xe0] sm:$0xff]
    %v1127 = vld [vmem:[%s1097 + $0xe8] sm:$0xff]
    %v1128 = vld [vmem:[%s1097 + $0xf0] sm:$0xff]
    %v1129 = vld [vmem:[%s1097 + $0xf8] sm:$0xff]
    %v1130 = vld [vmem:[%s1097 + $0x100] sm:$0xff]
    %v1131 = vld [vmem:[%s1097 + $0x108] sm:$0xff]
    %v1132 = vld [vmem:[%s1097 + $0x110] sm:$0xff]
    %v1133 = vld [vmem:[%s1097 + $0x118] sm:$0xff]
    %v1134 = vld [vmem:[%s1097 + $0x120] sm:$0xff]
    %v1135 = vld [vmem:[%s1097 + $0x128] sm:$0xff]
    %v1136 = vld [vmem:[%s1097 + $0x130] sm:$0xff]
    %v1137 = vld [vmem:[%s1097 + $0x138] sm:$0xff]
    %v1138 = vld [vmem:[%s1097 + $0x140] sm:$0xff]
    %v1139 = vld [vmem:[%s1097 + $0x148] sm:$0xff]
    %v1140 = vld [vmem:[%s1097 + $0x150] sm:$0xff]
    %v1141 = vld [vmem:[%s1097 + $0x158] sm:$0xff]
    %v1142 = vld [vmem:[%s1097 + $0x160] sm:$0xff]
    %v1143 = vld [vmem:[%s1097 + $0x168] sm:$0xff]
    %v1144 = vld [vmem:[%s1097 + $0x170] sm:$0xff]
    %v1145 = vld [vmem:[%s1097 + $0x178] sm:$0xff]
    %v1146 = vld [vmem:[%s1097 + $0x180] sm:$0xff]
    %v1147 = vld [vmem:[%s1097 + $0x188] sm:$0xff]
    %v1148 = vld [vmem:[%s1097 + $0x190] sm:$0xff]
    %v1149 = vld [vmem:[%s1097 + $0x198] sm:$0xff]
    %v1150 = vld [vmem:[%s1097 + $0x1a0] sm:$0xff]
    %v1151 = vld [vmem:[%s1097 + $0x1a8] sm:$0xff]
    %v1152 = vld [vmem:[%s1097 + $0x1b0] sm:$0xff]
    %v1153 = vld [vmem:[%s1097 + $0x1b8] sm:$0xff]
    %v1154 = vld [vmem:[%s1097 + $0x1c0] sm:$0xff]
    %v1155 = vld [vmem:[%s1097 + $0x1c8] sm:$0xff]
    %v1156 = vld [vmem:[%s1097 + $0x1d0] sm:$0xff]
    %v1157 = vld [vmem:[%s1097 + $0x1d8] sm:$0xff]
    %v1158 = vld [vmem:[%s1097 + $0x1e0] sm:$0xff]
    %v1159 = vld [vmem:[%s1097 + $0x1e8] sm:$0xff]
    %v1160 = vld [vmem:[%s1097 + $0x1f0] sm:$0xff]
    %v1161 = vld [vmem:[%s1097 + $0x1f8] sm:$0xff]
    %s1162 = scalar_lea.vmem [#allocation4], 3072
    %v1163 = vld [vmem:[%s1162] sm:$0xff]
    %v1164 = vld [vmem:[%s1162 + $0x8] sm:$0xff]
    %v1165 = vld [vmem:[%s1162 + $0x10] sm:$0xff]
    %v1166 = vld [vmem:[%s1162 + $0x18] sm:$0xff]
    %v1167 = vld [vmem:[%s1162 + $0x20] sm:$0xff]
    %v1168 = vld [vmem:[%s1162 + $0x28] sm:$0xff]
    %v1169 = vld [vmem:[%s1162 + $0x30] sm:$0xff]
    %v1170 = vld [vmem:[%s1162 + $0x38] sm:$0xff]
    %v1171 = vld [vmem:[%s1162 + $0x40] sm:$0xff]
    %v1172 = vld [vmem:[%s1162 + $0x48] sm:$0xff]
    %v1173 = vld [vmem:[%s1162 + $0x50] sm:$0xff]
    %v1174 = vld [vmem:[%s1162 + $0x58] sm:$0xff]
    %v1175 = vld [vmem:[%s1162 + $0x60] sm:$0xff]
    %v1176 = vld [vmem:[%s1162 + $0x68] sm:$0xff]
    %v1177 = vld [vmem:[%s1162 + $0x70] sm:$0xff]
    %v1178 = vld [vmem:[%s1162 + $0x78] sm:$0xff]
    %v1179 = vld [vmem:[%s1162 + $0x80] sm:$0xff]
    %v1180 = vld [vmem:[%s1162 + $0x88] sm:$0xff]
    %v1181 = vld [vmem:[%s1162 + $0x90] sm:$0xff]
    %v1182 = vld [vmem:[%s1162 + $0x98] sm:$0xff]
    %v1183 = vld [vmem:[%s1162 + $0xa0] sm:$0xff]
    %v1184 = vld [vmem:[%s1162 + $0xa8] sm:$0xff]
    %v1185 = vld [vmem:[%s1162 + $0xb0] sm:$0xff]
    %v1186 = vld [vmem:[%s1162 + $0xb8] sm:$0xff]
    %v1187 = vld [vmem:[%s1162 + $0xc0] sm:$0xff]
    %v1188 = vld [vmem:[%s1162 + $0xc8] sm:$0xff]
    %v1189 = vld [vmem:[%s1162 + $0xd0] sm:$0xff]
    %v1190 = vld [vmem:[%s1162 + $0xd8] sm:$0xff]
    %v1191 = vld [vmem:[%s1162 + $0xe0] sm:$0xff]
    %v1192 = vld [vmem:[%s1162 + $0xe8] sm:$0xff]
    %v1193 = vld [vmem:[%s1162 + $0xf0] sm:$0xff]
    %v1194 = vld [vmem:[%s1162 + $0xf8] sm:$0xff]
    %v1195 = vld [vmem:[%s1162 + $0x100] sm:$0xff]
    %v1196 = vld [vmem:[%s1162 + $0x108] sm:$0xff]
    %v1197 = vld [vmem:[%s1162 + $0x110] sm:$0xff]
    %v1198 = vld [vmem:[%s1162 + $0x118] sm:$0xff]
    %v1199 = vld [vmem:[%s1162 + $0x120] sm:$0xff]
    %v1200 = vld [vmem:[%s1162 + $0x128] sm:$0xff]
    %v1201 = vld [vmem:[%s1162 + $0x130] sm:$0xff]
    %v1202 = vld [vmem:[%s1162 + $0x138] sm:$0xff]
    %v1203 = vld [vmem:[%s1162 + $0x140] sm:$0xff]
    %v1204 = vld [vmem:[%s1162 + $0x148] sm:$0xff]
    %v1205 = vld [vmem:[%s1162 + $0x150] sm:$0xff]
    %v1206 = vld [vmem:[%s1162 + $0x158] sm:$0xff]
    %v1207 = vld [vmem:[%s1162 + $0x160] sm:$0xff]
    %v1208 = vld [vmem:[%s1162 + $0x168] sm:$0xff]
    %v1209 = vld [vmem:[%s1162 + $0x170] sm:$0xff]
    %v1210 = vld [vmem:[%s1162 + $0x178] sm:$0xff]
    %v1211 = vld [vmem:[%s1162 + $0x180] sm:$0xff]
    %v1212 = vld [vmem:[%s1162 + $0x188] sm:$0xff]
    %v1213 = vld [vmem:[%s1162 + $0x190] sm:$0xff]
    %v1214 = vld [vmem:[%s1162 + $0x198] sm:$0xff]
    %v1215 = vld [vmem:[%s1162 + $0x1a0] sm:$0xff]
    %v1216 = vld [vmem:[%s1162 + $0x1a8] sm:$0xff]
    %v1217 = vld [vmem:[%s1162 + $0x1b0] sm:$0xff]
    %v1218 = vld [vmem:[%s1162 + $0x1b8] sm:$0xff]
    %v1219 = vld [vmem:[%s1162 + $0x1c0] sm:$0xff]
    %v1220 = vld [vmem:[%s1162 + $0x1c8] sm:$0xff]
    %v1221 = vld [vmem:[%s1162 + $0x1d0] sm:$0xff]
    %v1222 = vld [vmem:[%s1162 + $0x1d8] sm:$0xff]
    %v1223 = vld [vmem:[%s1162 + $0x1e0] sm:$0xff]
    %v1224 = vld [vmem:[%s1162 + $0x1e8] sm:$0xff]
    %v1225 = vld [vmem:[%s1162 + $0x1f0] sm:$0xff]
    %v1226 = vld [vmem:[%s1162 + $0x1f8] sm:$0xff]
    %1227 = vmatprep.subr.mxu0 %v1194
    %1228 = vmatpush1.msra.mxu0 %v1193
    %1229 = vmatprep.subr.mxu0 %v1192
    %1230 = vmatpush1.msra.mxu0 %v1191
    %1231 = vmatprep.subr.mxu0 %v1190
    %1232 = vmatpush1.msra.mxu0 %v1189
    %1233 = vmatprep.subr.mxu0 %v1188
    %1234 = vmatpush1.msra.mxu0 %v1187
    %1235 = vmatprep.subr.mxu0 %v1186
    %1236 = vmatpush1.msra.mxu0 %v1185
    %1237 = vmatprep.subr.mxu0 %v1184
    %1238 = vmatpush1.msra.mxu0 %v1183
    %1239 = vmatprep.subr.mxu0 %v1182
    %1240 = vmatpush1.msra.mxu0 %v1181
    %1241 = vmatprep.subr.mxu0 %v1180
    %1242 = vmatpush1.msra.mxu0 %v1179
    %1243 = vmatprep.subr.mxu0 %v1178
    %1244 = vmatpush1.msra.mxu0 %v1177
    %1245 = vmatprep.subr.mxu0 %v1176
    %1246 = vmatpush1.msra.mxu0 %v1175
    %1247 = vmatprep.subr.mxu0 %v1174
    %1248 = vmatpush1.msra.mxu0 %v1173
    %1249 = vmatprep.subr.mxu0 %v1172
    %1250 = vmatpush1.msra.mxu0 %v1171
    %1251 = vmatprep.subr.mxu0 %v1170
    %1252 = vmatpush1.msra.mxu0 %v1169
    %1253 = vmatprep.subr.mxu0 %v1168
    %1254 = vmatpush1.msra.mxu0 %v1167
    %1255 = vmatprep.subr.mxu0 %v1166
    %1256 = vmatpush1.msra.mxu0 %v1165
    %1257 = vmatprep.subr.mxu0 %v1164
    %1258 = vmatpush1.msra.mxu0 %v1163
    %1259 = vmatprep.subr.mxu0 %v1226
    %1260 = vmatpush2.msra.mxu0 %v1225
    %1261 = vmatprep.subr.mxu0 %v1224
    %1262 = vmatpush2.msra.mxu0 %v1223
    %1263 = vmatprep.subr.mxu0 %v1222
    %1264 = vmatpush2.msra.mxu0 %v1221
    %1265 = vmatprep.subr.mxu0 %v1220
    %1266 = vmatpush2.msra.mxu0 %v1219
    %1267 = vmatprep.subr.mxu0 %v1218
    %1268 = vmatpush2.msra.mxu0 %v1217
    %1269 = vmatprep.subr.mxu0 %v1216
    %1270 = vmatpush2.msra.mxu0 %v1215
    %1271 = vmatprep.subr.mxu0 %v1214
    %1272 = vmatpush2.msra.mxu0 %v1213
    %1273 = vmatprep.subr.mxu0 %v1212
    %1274 = vmatpush2.msra.mxu0 %v1211
    %1275 = vmatprep.subr.mxu0 %v1210
    %1276 = vmatpush2.msra.mxu0 %v1209
    %1277 = vmatprep.subr.mxu0 %v1208
    %1278 = vmatpush2.msra.mxu0 %v1207
    %1279 = vmatprep.subr.mxu0 %v1206
    %1280 = vmatpush2.msra.mxu0 %v1205
    %1281 = vmatprep.subr.mxu0 %v1204
    %1282 = vmatpush2.msra.mxu0 %v1203
    %1283 = vmatprep.subr.mxu0 %v1202
    %1284 = vmatpush2.msra.mxu0 %v1201
    %1285 = vmatprep.subr.mxu0 %v1200
    %1286 = vmatpush2.msra.mxu0 %v1199
    %1287 = vmatprep.subr.mxu0 %v1198
    %1288 = vmatpush2.msra.mxu0 %v1197
    %1289 = vmatprep.subr.mxu0 %v1196
    %1290 = vmatpush2.msra.mxu0 %v1195
    %1291 = vmatprep.mubr.f32.mxu0 %v1082
    %1292 = vmatmul.mubr.f32.gmra.mxu0 %v1081
    %v1293 = vpop.f32.mrf.mxu0
    %v1294 = vadd.f32 0.0, %v1293
    %v1295 = vpop.f32.mrf.mxu0
    %v1296 = vadd.f32 0.0, %v1295
    %1297 = vmatprep.mubr.f32.mxu0 %v1084
    %1298 = vmatmul.mubr.f32.gmra.mxu0 %v1083
    %v1299 = vpop.f32.mrf.mxu0
    %v1300 = vadd.f32 0.0, %v1299
    %v1301 = vpop.f32.mrf.mxu0
    %v1302 = vadd.f32 0.0, %v1301
    %1303 = vdwg.mxu0
    %1304 = vmatprep.subr.mxu0 %v1129
    %1305 = vmatpush1.msra.mxu0 %v1128
    %1306 = vmatprep.subr.mxu0 %v1127
    %1307 = vmatpush1.msra.mxu0 %v1126
    %1308 = vmatprep.subr.mxu0 %v1125
    %1309 = vmatpush1.msra.mxu0 %v1124
    %1310 = vmatprep.subr.mxu0 %v1123
    %1311 = vmatpush1.msra.mxu0 %v1122
    %1312 = vmatprep.subr.mxu0 %v1121
    %1313 = vmatpush1.msra.mxu0 %v1120
    %1314 = vmatprep.subr.mxu0 %v1119
    %1315 = vmatpush1.msra.mxu0 %v1118
    %1316 = vmatprep.subr.mxu0 %v1117
    %1317 = vmatpush1.msra.mxu0 %v1116
    %1318 = vmatprep.subr.mxu0 %v1115
    %1319 = vmatpush1.msra.mxu0 %v1114
    %1320 = vmatprep.subr.mxu0 %v1113
    %1321 = vmatpush1.msra.mxu0 %v1112
    %1322 = vmatprep.subr.mxu0 %v1111
    %1323 = vmatpush1.msra.mxu0 %v1110
    %1324 = vmatprep.subr.mxu0 %v1109
    %1325 = vmatpush1.msra.mxu0 %v1108
    %1326 = vmatprep.subr.mxu0 %v1107
    %1327 = vmatpush1.msra.mxu0 %v1106
    %1328 = vmatprep.subr.mxu0 %v1105
    %1329 = vmatpush1.msra.mxu0 %v1104
    %1330 = vmatprep.subr.mxu0 %v1103
    %1331 = vmatpush1.msra.mxu0 %v1102
    %1332 = vmatprep.subr.mxu0 %v1101
    %1333 = vmatpush1.msra.mxu0 %v1100
    %1334 = vmatprep.subr.mxu0 %v1099
    %1335 = vmatpush1.msra.mxu0 %v1098
    %1336 = vmatprep.subr.mxu0 %v1161
    %1337 = vmatpush2.msra.mxu0 %v1160
    %1338 = vmatprep.subr.mxu0 %v1159
    %1339 = vmatpush2.msra.mxu0 %v1158
    %1340 = vmatprep.subr.mxu0 %v1157
    %1341 = vmatpush2.msra.mxu0 %v1156
    %1342 = vmatprep.subr.mxu0 %v1155
    %1343 = vmatpush2.msra.mxu0 %v1154
    %1344 = vmatprep.subr.mxu0 %v1153
    %1345 = vmatpush2.msra.mxu0 %v1152
    %1346 = vmatprep.subr.mxu0 %v1151
    %1347 = vmatpush2.msra.mxu0 %v1150
    %1348 = vmatprep.subr.mxu0 %v1149
    %1349 = vmatpush2.msra.mxu0 %v1148
    %1350 = vmatprep.subr.mxu0 %v1147
    %1351 = vmatpush2.msra.mxu0 %v1146
    %1352 = vmatprep.subr.mxu0 %v1145
    %1353 = vmatpush2.msra.mxu0 %v1144
    %1354 = vmatprep.subr.mxu0 %v1143
    %1355 = vmatpush2.msra.mxu0 %v1142
    %1356 = vmatprep.subr.mxu0 %v1141
    %1357 = vmatpush2.msra.mxu0 %v1140
    %1358 = vmatprep.subr.mxu0 %v1139
    %1359 = vmatpush2.msra.mxu0 %v1138
    %1360 = vmatprep.subr.mxu0 %v1137
    %1361 = vmatpush2.msra.mxu0 %v1136
    %1362 = vmatprep.subr.mxu0 %v1135
    %1363 = vmatpush2.msra.mxu0 %v1134
    %1364 = vmatprep.subr.mxu0 %v1133
    %1365 = vmatpush2.msra.mxu0 %v1132
    %1366 = vmatprep.subr.mxu0 %v1131
    %1367 = vmatpush2.msra.mxu0 %v1130
    %1368 = vmatprep.mubr.f32.mxu0 %v1070
    %1369 = vmatmul.mubr.f32.gmra.mxu0 %v1069
    %v1370 = vpop.f32.mrf.mxu0
    %v1371 = vadd.f32 %v1294, %v1370
    %v1372 = vpop.f32.mrf.mxu0
    %v1373 = vadd.f32 %v1296, %v1372
    %1374 = vmatprep.mubr.f32.mxu0 %v1072
    %1375 = vmatmul.mubr.f32.gmra.mxu0 %v1071
    %v1376 = vpop.f32.mrf.mxu0
    %v1377 = vadd.f32 %v1300, %v1376
    %v1378 = vpop.f32.mrf.mxu0
    %v1379 = vadd.f32 %v1302, %v1378
    %1380 = vdwg.mxu0
    %s1381 = scalar_lea.vmem [#allocation4], 4096
    %v1382 = vld [vmem:[%s1381] sm:$0xff]
    %v1383 = vld [vmem:[%s1381 + $0x8] sm:$0xff]
    %v1384 = vld [vmem:[%s1381 + $0x10] sm:$0xff]
    %v1385 = vld [vmem:[%s1381 + $0x18] sm:$0xff]
    %v1386 = vld [vmem:[%s1381 + $0x20] sm:$0xff]
    %v1387 = vld [vmem:[%s1381 + $0x28] sm:$0xff]
    %v1388 = vld [vmem:[%s1381 + $0x30] sm:$0xff]
    %v1389 = vld [vmem:[%s1381 + $0x38] sm:$0xff]
    %v1390 = vld [vmem:[%s1381 + $0x40] sm:$0xff]
    %v1391 = vld [vmem:[%s1381 + $0x48] sm:$0xff]
    %v1392 = vld [vmem:[%s1381 + $0x50] sm:$0xff]
    %v1393 = vld [vmem:[%s1381 + $0x58] sm:$0xff]
    %v1394 = vld [vmem:[%s1381 + $0x60] sm:$0xff]
    %v1395 = vld [vmem:[%s1381 + $0x68] sm:$0xff]
    %v1396 = vld [vmem:[%s1381 + $0x70] sm:$0xff]
    %v1397 = vld [vmem:[%s1381 + $0x78] sm:$0xff]
    %v1398 = vld [vmem:[%s1381 + $0x80] sm:$0xff]
    %v1399 = vld [vmem:[%s1381 + $0x88] sm:$0xff]
    %v1400 = vld [vmem:[%s1381 + $0x90] sm:$0xff]
    %v1401 = vld [vmem:[%s1381 + $0x98] sm:$0xff]
    %v1402 = vld [vmem:[%s1381 + $0xa0] sm:$0xff]
    %v1403 = vld [vmem:[%s1381 + $0xa8] sm:$0xff]
    %v1404 = vld [vmem:[%s1381 + $0xb0] sm:$0xff]
    %v1405 = vld [vmem:[%s1381 + $0xb8] sm:$0xff]
    %v1406 = vld [vmem:[%s1381 + $0xc0] sm:$0xff]
    %v1407 = vld [vmem:[%s1381 + $0xc8] sm:$0xff]
    %v1408 = vld [vmem:[%s1381 + $0xd0] sm:$0xff]
    %v1409 = vld [vmem:[%s1381 + $0xd8] sm:$0xff]
    %v1410 = vld [vmem:[%s1381 + $0xe0] sm:$0xff]
    %v1411 = vld [vmem:[%s1381 + $0xe8] sm:$0xff]
    %v1412 = vld [vmem:[%s1381 + $0xf0] sm:$0xff]
    %v1413 = vld [vmem:[%s1381 + $0xf8] sm:$0xff]
    %v1414 = vld [vmem:[%s1381 + $0x100] sm:$0xff]
    %v1415 = vld [vmem:[%s1381 + $0x108] sm:$0xff]
    %v1416 = vld [vmem:[%s1381 + $0x110] sm:$0xff]
    %v1417 = vld [vmem:[%s1381 + $0x118] sm:$0xff]
    %v1418 = vld [vmem:[%s1381 + $0x120] sm:$0xff]
    %v1419 = vld [vmem:[%s1381 + $0x128] sm:$0xff]
    %v1420 = vld [vmem:[%s1381 + $0x130] sm:$0xff]
    %v1421 = vld [vmem:[%s1381 + $0x138] sm:$0xff]
    %v1422 = vld [vmem:[%s1381 + $0x140] sm:$0xff]
    %v1423 = vld [vmem:[%s1381 + $0x148] sm:$0xff]
    %v1424 = vld [vmem:[%s1381 + $0x150] sm:$0xff]
    %v1425 = vld [vmem:[%s1381 + $0x158] sm:$0xff]
    %v1426 = vld [vmem:[%s1381 + $0x160] sm:$0xff]
    %v1427 = vld [vmem:[%s1381 + $0x168] sm:$0xff]
    %v1428 = vld [vmem:[%s1381 + $0x170] sm:$0xff]
    %v1429 = vld [vmem:[%s1381 + $0x178] sm:$0xff]
    %v1430 = vld [vmem:[%s1381 + $0x180] sm:$0xff]
    %v1431 = vld [vmem:[%s1381 + $0x188] sm:$0xff]
    %v1432 = vld [vmem:[%s1381 + $0x190] sm:$0xff]
    %v1433 = vld [vmem:[%s1381 + $0x198] sm:$0xff]
    %v1434 = vld [vmem:[%s1381 + $0x1a0] sm:$0xff]
    %v1435 = vld [vmem:[%s1381 + $0x1a8] sm:$0xff]
    %v1436 = vld [vmem:[%s1381 + $0x1b0] sm:$0xff]
    %v1437 = vld [vmem:[%s1381 + $0x1b8] sm:$0xff]
    %v1438 = vld [vmem:[%s1381 + $0x1c0] sm:$0xff]
    %v1439 = vld [vmem:[%s1381 + $0x1c8] sm:$0xff]
    %v1440 = vld [vmem:[%s1381 + $0x1d0] sm:$0xff]
    %v1441 = vld [vmem:[%s1381 + $0x1d8] sm:$0xff]
    %v1442 = vld [vmem:[%s1381 + $0x1e0] sm:$0xff]
    %v1443 = vld [vmem:[%s1381 + $0x1e8] sm:$0xff]
    %v1444 = vld [vmem:[%s1381 + $0x1f0] sm:$0xff]
    %v1445 = vld [vmem:[%s1381 + $0x1f8] sm:$0xff]
    %1446 = vmatprep.subr.mxu0 %v1413
    %1447 = vmatpush1.msra.mxu0 %v1412
    %1448 = vmatprep.subr.mxu0 %v1411
    %1449 = vmatpush1.msra.mxu0 %v1410
    %1450 = vmatprep.subr.mxu0 %v1409
    %1451 = vmatpush1.msra.mxu0 %v1408
    %1452 = vmatprep.subr.mxu0 %v1407
    %1453 = vmatpush1.msra.mxu0 %v1406
    %1454 = vmatprep.subr.mxu0 %v1405
    %1455 = vmatpush1.msra.mxu0 %v1404
    %1456 = vmatprep.subr.mxu0 %v1403
    %1457 = vmatpush1.msra.mxu0 %v1402
    %1458 = vmatprep.subr.mxu0 %v1401
    %1459 = vmatpush1.msra.mxu0 %v1400
    %1460 = vmatprep.subr.mxu0 %v1399
    %1461 = vmatpush1.msra.mxu0 %v1398
    %1462 = vmatprep.subr.mxu0 %v1397
    %1463 = vmatpush1.msra.mxu0 %v1396
    %1464 = vmatprep.subr.mxu0 %v1395
    %1465 = vmatpush1.msra.mxu0 %v1394
    %1466 = vmatprep.subr.mxu0 %v1393
    %1467 = vmatpush1.msra.mxu0 %v1392
    %1468 = vmatprep.subr.mxu0 %v1391
    %1469 = vmatpush1.msra.mxu0 %v1390
    %1470 = vmatprep.subr.mxu0 %v1389
    %1471 = vmatpush1.msra.mxu0 %v1388
    %1472 = vmatprep.subr.mxu0 %v1387
    %1473 = vmatpush1.msra.mxu0 %v1386
    %1474 = vmatprep.subr.mxu0 %v1385
    %1475 = vmatpush1.msra.mxu0 %v1384
    %1476 = vmatprep.subr.mxu0 %v1383
    %1477 = vmatpush1.msra.mxu0 %v1382
    %1478 = vmatprep.subr.mxu0 %v1445
    %1479 = vmatpush2.msra.mxu0 %v1444
    %1480 = vmatprep.subr.mxu0 %v1443
    %1481 = vmatpush2.msra.mxu0 %v1442
    %1482 = vmatprep.subr.mxu0 %v1441
    %1483 = vmatpush2.msra.mxu0 %v1440
    %1484 = vmatprep.subr.mxu0 %v1439
    %1485 = vmatpush2.msra.mxu0 %v1438
    %1486 = vmatprep.subr.mxu0 %v1437
    %1487 = vmatpush2.msra.mxu0 %v1436
    %1488 = vmatprep.subr.mxu0 %v1435
    %1489 = vmatpush2.msra.mxu0 %v1434
    %1490 = vmatprep.subr.mxu0 %v1433
    %1491 = vmatpush2.msra.mxu0 %v1432
    %1492 = vmatprep.subr.mxu0 %v1431
    %1493 = vmatpush2.msra.mxu0 %v1430
    %1494 = vmatprep.subr.mxu0 %v1429
    %1495 = vmatpush2.msra.mxu0 %v1428
    %1496 = vmatprep.subr.mxu0 %v1427
    %1497 = vmatpush2.msra.mxu0 %v1426
    %1498 = vmatprep.subr.mxu0 %v1425
    %1499 = vmatpush2.msra.mxu0 %v1424
    %1500 = vmatprep.subr.mxu0 %v1423
    %1501 = vmatpush2.msra.mxu0 %v1422
    %1502 = vmatprep.subr.mxu0 %v1421
    %1503 = vmatpush2.msra.mxu0 %v1420
    %1504 = vmatprep.subr.mxu0 %v1419
    %1505 = vmatpush2.msra.mxu0 %v1418
    %1506 = vmatprep.subr.mxu0 %v1417
    %1507 = vmatpush2.msra.mxu0 %v1416
    %1508 = vmatprep.subr.mxu0 %v1415
    %1509 = vmatpush2.msra.mxu0 %v1414
    %1510 = vmatprep.mubr.f32.mxu0 %v1094
    %1511 = vmatmul.mubr.f32.gmra.mxu0 %v1093
    %v1512 = vpop.f32.mrf.mxu0
    %v1513 = vadd.f32 0.0, %v1512
    %v1514 = vpop.f32.mrf.mxu0
    %v1515 = vadd.f32 0.0, %v1514
    %1516 = vmatprep.mubr.f32.mxu0 %v1096
    %1517 = vmatmul.mubr.f32.gmra.mxu0 %v1095
    %v1518 = vpop.f32.mrf.mxu0
    %v1519 = vadd.f32 0.0, %v1518
    %v1520 = vpop.f32.mrf.mxu0
    %v1521 = vadd.f32 0.0, %v1520
    %1522 = vdwg.mxu0
    %v1523 = vadd.f32 %v1371, %v1513
    %v1524 = vadd.f32 %v1373, %v1515
    %v1525 = vadd.f32 %v1377, %v1519
    %v1526 = vadd.f32 %v1379, %v1521
    %s1527 = scalar_lea.vmem [#allocation6], 4
    %v1528 = vld [vmem:[%s1527] sm:$0x3]
    %v1530 = vlaneseq
    %v1531 = vshrl.u32 %v1530, 7
    %v1532 = vsub.s32 0, %v1531
    %v1533 = vrot.slane %v1528, %v1532
    %v1534 = vlaneseq
    %v1535 = vshrl.u32 %v1534, 7
    %v1536 = vsub.s32 1, %v1535
    %v1537 = vrot.slane %v1528, %v1536
    %v1540 = vadd.f32 %v1523, %v1533
    %v1541 = vadd.f32 %v1524, %v1537
    %v1542 = vadd.f32 %v1525, %v1533
    %v1543 = vadd.f32 %v1526, %v1537
    %v1544 = vmax.f32 %v1540, 0.0
    %v1545 = vmax.f32 %v1541, 0.0
    %v1546 = vmax.f32 %v1542, 0.0
    %v1547 = vmax.f32 %v1543, 0.0
    %v1548 = vrot.slane %v1544, 7
    %v1549 = vrot.slane %v1545, 7
    %v1550 = vrot.slane %v1546, 7
    %v1551 = vrot.slane %v1547, 7
    %v1552 = vsel %vm123, %v1548, %v1550
    %v1553 = vsel %vm123, %v1549, %v1551
    %v1554 = vsel %vm123, %v1550, %v1548
    %v1555 = vsel %vm123, %v1551, %v1549
    %v1556 = vmul.f32 %v107, %v1554
    %v1557 = vmul.f32 %v107, %v1555
    %v1558 = vmul.f32 %v108, %v1552
    %v1559 = vmul.f32 %v108, %v1553
    %v1560 = vrot.slane %v1544, 1
    %v1561 = vrot.slane %v1545, 1
    %v1562 = vrot.slane %v1546, 1
    %v1563 = vrot.slane %v1547, 1
    %v1564 = vsel %vm136, %v1560, %v1562
    %v1565 = vsel %vm136, %v1561, %v1563
    %v1566 = vsel %vm136, %v1562, %v1560
    %v1567 = vsel %vm136, %v1563, %v1561
    %v1568 = vmul.f32 %v113, %v1564
    %v1569 = vmul.f32 %v113, %v1565
    %v1570 = vmul.f32 %v114, %v1566
    %v1571 = vmul.f32 %v114, %v1567
    %s1572 = scalar_lea.vmem [#allocation4], 5120
    %v1573 = vld [vmem:[%s1572] sm:$0xff]
    %v1574 = vld [vmem:[%s1572 + $0x8] sm:$0xff]
    %v1575 = vld [vmem:[%s1572 + $0x10] sm:$0xff]
    %v1576 = vld [vmem:[%s1572 + $0x18] sm:$0xff]
    %v1577 = vld [vmem:[%s1572 + $0x20] sm:$0xff]
    %v1578 = vld [vmem:[%s1572 + $0x28] sm:$0xff]
    %v1579 = vld [vmem:[%s1572 + $0x30] sm:$0xff]
    %v1580 = vld [vmem:[%s1572 + $0x38] sm:$0xff]
    %v1581 = vld [vmem:[%s1572 + $0x40] sm:$0xff]
    %v1582 = vld [vmem:[%s1572 + $0x48] sm:$0xff]
    %v1583 = vld [vmem:[%s1572 + $0x50] sm:$0xff]
    %v1584 = vld [vmem:[%s1572 + $0x58] sm:$0xff]
    %v1585 = vld [vmem:[%s1572 + $0x60] sm:$0xff]
    %v1586 = vld [vmem:[%s1572 + $0x68] sm:$0xff]
    %v1587 = vld [vmem:[%s1572 + $0x70] sm:$0xff]
    %v1588 = vld [vmem:[%s1572 + $0x78] sm:$0xff]
    %v1589 = vld [vmem:[%s1572 + $0x80] sm:$0xff]
    %v1590 = vld [vmem:[%s1572 + $0x88] sm:$0xff]
    %v1591 = vld [vmem:[%s1572 + $0x90] sm:$0xff]
    %v1592 = vld [vmem:[%s1572 + $0x98] sm:$0xff]
    %v1593 = vld [vmem:[%s1572 + $0xa0] sm:$0xff]
    %v1594 = vld [vmem:[%s1572 + $0xa8] sm:$0xff]
    %v1595 = vld [vmem:[%s1572 + $0xb0] sm:$0xff]
    %v1596 = vld [vmem:[%s1572 + $0xb8] sm:$0xff]
    %v1597 = vld [vmem:[%s1572 + $0xc0] sm:$0xff]
    %v1598 = vld [vmem:[%s1572 + $0xc8] sm:$0xff]
    %v1599 = vld [vmem:[%s1572 + $0xd0] sm:$0xff]
    %v1600 = vld [vmem:[%s1572 + $0xd8] sm:$0xff]
    %v1601 = vld [vmem:[%s1572 + $0xe0] sm:$0xff]
    %v1602 = vld [vmem:[%s1572 + $0xe8] sm:$0xff]
    %v1603 = vld [vmem:[%s1572 + $0xf0] sm:$0xff]
    %v1604 = vld [vmem:[%s1572 + $0xf8] sm:$0xff]
    %v1605 = vld [vmem:[%s1572 + $0x100] sm:$0xff]
    %v1606 = vld [vmem:[%s1572 + $0x108] sm:$0xff]
    %v1607 = vld [vmem:[%s1572 + $0x110] sm:$0xff]
    %v1608 = vld [vmem:[%s1572 + $0x118] sm:$0xff]
    %v1609 = vld [vmem:[%s1572 + $0x120] sm:$0xff]
    %v1610 = vld [vmem:[%s1572 + $0x128] sm:$0xff]
    %v1611 = vld [vmem:[%s1572 + $0x130] sm:$0xff]
    %v1612 = vld [vmem:[%s1572 + $0x138] sm:$0xff]
    %v1613 = vld [vmem:[%s1572 + $0x140] sm:$0xff]
    %v1614 = vld [vmem:[%s1572 + $0x148] sm:$0xff]
    %v1615 = vld [vmem:[%s1572 + $0x150] sm:$0xff]
    %v1616 = vld [vmem:[%s1572 + $0x158] sm:$0xff]
    %v1617 = vld [vmem:[%s1572 + $0x160] sm:$0xff]
    %v1618 = vld [vmem:[%s1572 + $0x168] sm:$0xff]
    %v1619 = vld [vmem:[%s1572 + $0x170] sm:$0xff]
    %v1620 = vld [vmem:[%s1572 + $0x178] sm:$0xff]
    %v1621 = vld [vmem:[%s1572 + $0x180] sm:$0xff]
    %v1622 = vld [vmem:[%s1572 + $0x188] sm:$0xff]
    %v1623 = vld [vmem:[%s1572 + $0x190] sm:$0xff]
    %v1624 = vld [vmem:[%s1572 + $0x198] sm:$0xff]
    %v1625 = vld [vmem:[%s1572 + $0x1a0] sm:$0xff]
    %v1626 = vld [vmem:[%s1572 + $0x1a8] sm:$0xff]
    %v1627 = vld [vmem:[%s1572 + $0x1b0] sm:$0xff]
    %v1628 = vld [vmem:[%s1572 + $0x1b8] sm:$0xff]
    %v1629 = vld [vmem:[%s1572 + $0x1c0] sm:$0xff]
    %v1630 = vld [vmem:[%s1572 + $0x1c8] sm:$0xff]
    %v1631 = vld [vmem:[%s1572 + $0x1d0] sm:$0xff]
    %v1632 = vld [vmem:[%s1572 + $0x1d8] sm:$0xff]
    %v1633 = vld [vmem:[%s1572 + $0x1e0] sm:$0xff]
    %v1634 = vld [vmem:[%s1572 + $0x1e8] sm:$0xff]
    %v1635 = vld [vmem:[%s1572 + $0x1f0] sm:$0xff]
    %v1636 = vld [vmem:[%s1572 + $0x1f8] sm:$0xff]
    %s1637 = scalar_lea.vmem [#allocation4], 4608
    %v1638 = vld [vmem:[%s1637] sm:$0xff]
    %v1639 = vld [vmem:[%s1637 + $0x8] sm:$0xff]
    %v1640 = vld [vmem:[%s1637 + $0x10] sm:$0xff]
    %v1641 = vld [vmem:[%s1637 + $0x18] sm:$0xff]
    %v1642 = vld [vmem:[%s1637 + $0x20] sm:$0xff]
    %v1643 = vld [vmem:[%s1637 + $0x28] sm:$0xff]
    %v1644 = vld [vmem:[%s1637 + $0x30] sm:$0xff]
    %v1645 = vld [vmem:[%s1637 + $0x38] sm:$0xff]
    %v1646 = vld [vmem:[%s1637 + $0x40] sm:$0xff]
    %v1647 = vld [vmem:[%s1637 + $0x48] sm:$0xff]
    %v1648 = vld [vmem:[%s1637 + $0x50] sm:$0xff]
    %v1649 = vld [vmem:[%s1637 + $0x58] sm:$0xff]
    %v1650 = vld [vmem:[%s1637 + $0x60] sm:$0xff]
    %v1651 = vld [vmem:[%s1637 + $0x68] sm:$0xff]
    %v1652 = vld [vmem:[%s1637 + $0x70] sm:$0xff]
    %v1653 = vld [vmem:[%s1637 + $0x78] sm:$0xff]
    %v1654 = vld [vmem:[%s1637 + $0x80] sm:$0xff]
    %v1655 = vld [vmem:[%s1637 + $0x88] sm:$0xff]
    %v1656 = vld [vmem:[%s1637 + $0x90] sm:$0xff]
    %v1657 = vld [vmem:[%s1637 + $0x98] sm:$0xff]
    %v1658 = vld [vmem:[%s1637 + $0xa0] sm:$0xff]
    %v1659 = vld [vmem:[%s1637 + $0xa8] sm:$0xff]
    %v1660 = vld [vmem:[%s1637 + $0xb0] sm:$0xff]
    %v1661 = vld [vmem:[%s1637 + $0xb8] sm:$0xff]
    %v1662 = vld [vmem:[%s1637 + $0xc0] sm:$0xff]
    %v1663 = vld [vmem:[%s1637 + $0xc8] sm:$0xff]
    %v1664 = vld [vmem:[%s1637 + $0xd0] sm:$0xff]
    %v1665 = vld [vmem:[%s1637 + $0xd8] sm:$0xff]
    %v1666 = vld [vmem:[%s1637 + $0xe0] sm:$0xff]
    %v1667 = vld [vmem:[%s1637 + $0xe8] sm:$0xff]
    %v1668 = vld [vmem:[%s1637 + $0xf0] sm:$0xff]
    %v1669 = vld [vmem:[%s1637 + $0xf8] sm:$0xff]
    %v1670 = vld [vmem:[%s1637 + $0x100] sm:$0xff]
    %v1671 = vld [vmem:[%s1637 + $0x108] sm:$0xff]
    %v1672 = vld [vmem:[%s1637 + $0x110] sm:$0xff]
    %v1673 = vld [vmem:[%s1637 + $0x118] sm:$0xff]
    %v1674 = vld [vmem:[%s1637 + $0x120] sm:$0xff]
    %v1675 = vld [vmem:[%s1637 + $0x128] sm:$0xff]
    %v1676 = vld [vmem:[%s1637 + $0x130] sm:$0xff]
    %v1677 = vld [vmem:[%s1637 + $0x138] sm:$0xff]
    %v1678 = vld [vmem:[%s1637 + $0x140] sm:$0xff]
    %v1679 = vld [vmem:[%s1637 + $0x148] sm:$0xff]
    %v1680 = vld [vmem:[%s1637 + $0x150] sm:$0xff]
    %v1681 = vld [vmem:[%s1637 + $0x158] sm:$0xff]
    %v1682 = vld [vmem:[%s1637 + $0x160] sm:$0xff]
    %v1683 = vld [vmem:[%s1637 + $0x168] sm:$0xff]
    %v1684 = vld [vmem:[%s1637 + $0x170] sm:$0xff]
    %v1685 = vld [vmem:[%s1637 + $0x178] sm:$0xff]
    %v1686 = vld [vmem:[%s1637 + $0x180] sm:$0xff]
    %v1687 = vld [vmem:[%s1637 + $0x188] sm:$0xff]
    %v1688 = vld [vmem:[%s1637 + $0x190] sm:$0xff]
    %v1689 = vld [vmem:[%s1637 + $0x198] sm:$0xff]
    %v1690 = vld [vmem:[%s1637 + $0x1a0] sm:$0xff]
    %v1691 = vld [vmem:[%s1637 + $0x1a8] sm:$0xff]
    %v1692 = vld [vmem:[%s1637 + $0x1b0] sm:$0xff]
    %v1693 = vld [vmem:[%s1637 + $0x1b8] sm:$0xff]
    %v1694 = vld [vmem:[%s1637 + $0x1c0] sm:$0xff]
    %v1695 = vld [vmem:[%s1637 + $0x1c8] sm:$0xff]
    %v1696 = vld [vmem:[%s1637 + $0x1d0] sm:$0xff]
    %v1697 = vld [vmem:[%s1637 + $0x1d8] sm:$0xff]
    %v1698 = vld [vmem:[%s1637 + $0x1e0] sm:$0xff]
    %v1699 = vld [vmem:[%s1637 + $0x1e8] sm:$0xff]
    %v1700 = vld [vmem:[%s1637 + $0x1f0] sm:$0xff]
    %v1701 = vld [vmem:[%s1637 + $0x1f8] sm:$0xff]
    %1702 = vmatprep.subr.mxu0 %v1669
    %1703 = vmatpush1.msra.mxu0 %v1668
    %1704 = vmatprep.subr.mxu0 %v1667
    %1705 = vmatpush1.msra.mxu0 %v1666
    %1706 = vmatprep.subr.mxu0 %v1665
    %1707 = vmatpush1.msra.mxu0 %v1664
    %1708 = vmatprep.subr.mxu0 %v1663
    %1709 = vmatpush1.msra.mxu0 %v1662
    %1710 = vmatprep.subr.mxu0 %v1661
    %1711 = vmatpush1.msra.mxu0 %v1660
    %1712 = vmatprep.subr.mxu0 %v1659
    %1713 = vmatpush1.msra.mxu0 %v1658
    %1714 = vmatprep.subr.mxu0 %v1657
    %1715 = vmatpush1.msra.mxu0 %v1656
    %1716 = vmatprep.subr.mxu0 %v1655
    %1717 = vmatpush1.msra.mxu0 %v1654
    %1718 = vmatprep.subr.mxu0 %v1653
    %1719 = vmatpush1.msra.mxu0 %v1652
    %1720 = vmatprep.subr.mxu0 %v1651
    %1721 = vmatpush1.msra.mxu0 %v1650
    %1722 = vmatprep.subr.mxu0 %v1649
    %1723 = vmatpush1.msra.mxu0 %v1648
    %1724 = vmatprep.subr.mxu0 %v1647
    %1725 = vmatpush1.msra.mxu0 %v1646
    %1726 = vmatprep.subr.mxu0 %v1645
    %1727 = vmatpush1.msra.mxu0 %v1644
    %1728 = vmatprep.subr.mxu0 %v1643
    %1729 = vmatpush1.msra.mxu0 %v1642
    %1730 = vmatprep.subr.mxu0 %v1641
    %1731 = vmatpush1.msra.mxu0 %v1640
    %1732 = vmatprep.subr.mxu0 %v1639
    %1733 = vmatpush1.msra.mxu0 %v1638
    %1734 = vmatprep.subr.mxu0 %v1701
    %1735 = vmatpush2.msra.mxu0 %v1700
    %1736 = vmatprep.subr.mxu0 %v1699
    %1737 = vmatpush2.msra.mxu0 %v1698
    %1738 = vmatprep.subr.mxu0 %v1697
    %1739 = vmatpush2.msra.mxu0 %v1696
    %1740 = vmatprep.subr.mxu0 %v1695
    %1741 = vmatpush2.msra.mxu0 %v1694
    %1742 = vmatprep.subr.mxu0 %v1693
    %1743 = vmatpush2.msra.mxu0 %v1692
    %1744 = vmatprep.subr.mxu0 %v1691
    %1745 = vmatpush2.msra.mxu0 %v1690
    %1746 = vmatprep.subr.mxu0 %v1689
    %1747 = vmatpush2.msra.mxu0 %v1688
    %1748 = vmatprep.subr.mxu0 %v1687
    %1749 = vmatpush2.msra.mxu0 %v1686
    %1750 = vmatprep.subr.mxu0 %v1685
    %1751 = vmatpush2.msra.mxu0 %v1684
    %1752 = vmatprep.subr.mxu0 %v1683
    %1753 = vmatpush2.msra.mxu0 %v1682
    %1754 = vmatprep.subr.mxu0 %v1681
    %1755 = vmatpush2.msra.mxu0 %v1680
    %1756 = vmatprep.subr.mxu0 %v1679
    %1757 = vmatpush2.msra.mxu0 %v1678
    %1758 = vmatprep.subr.mxu0 %v1677
    %1759 = vmatpush2.msra.mxu0 %v1676
    %1760 = vmatprep.subr.mxu0 %v1675
    %1761 = vmatpush2.msra.mxu0 %v1674
    %1762 = vmatprep.subr.mxu0 %v1673
    %1763 = vmatpush2.msra.mxu0 %v1672
    %1764 = vmatprep.subr.mxu0 %v1671
    %1765 = vmatpush2.msra.mxu0 %v1670
    %1766 = vmatprep.mubr.f32.mxu0 %v1557
    %1767 = vmatmul.mubr.f32.gmra.mxu0 %v1556
    %v1768 = vpop.f32.mrf.mxu0
    %v1769 = vadd.f32 0.0, %v1768
    %v1770 = vpop.f32.mrf.mxu0
    %v1771 = vadd.f32 0.0, %v1770
    %1772 = vmatprep.mubr.f32.mxu0 %v1559
    %1773 = vmatmul.mubr.f32.gmra.mxu0 %v1558
    %v1774 = vpop.f32.mrf.mxu0
    %v1775 = vadd.f32 0.0, %v1774
    %v1776 = vpop.f32.mrf.mxu0
    %v1777 = vadd.f32 0.0, %v1776
    %1778 = vdwg.mxu0
    %1779 = vmatprep.subr.mxu0 %v1604
    %1780 = vmatpush1.msra.mxu0 %v1603
    %1781 = vmatprep.subr.mxu0 %v1602
    %1782 = vmatpush1.msra.mxu0 %v1601
    %1783 = vmatprep.subr.mxu0 %v1600
    %1784 = vmatpush1.msra.mxu0 %v1599
    %1785 = vmatprep.subr.mxu0 %v1598
    %1786 = vmatpush1.msra.mxu0 %v1597
    %1787 = vmatprep.subr.mxu0 %v1596
    %1788 = vmatpush1.msra.mxu0 %v1595
    %1789 = vmatprep.subr.mxu0 %v1594
    %1790 = vmatpush1.msra.mxu0 %v1593
    %1791 = vmatprep.subr.mxu0 %v1592
    %1792 = vmatpush1.msra.mxu0 %v1591
    %1793 = vmatprep.subr.mxu0 %v1590
    %1794 = vmatpush1.msra.mxu0 %v1589
    %1795 = vmatprep.subr.mxu0 %v1588
    %1796 = vmatpush1.msra.mxu0 %v1587
    %1797 = vmatprep.subr.mxu0 %v1586
    %1798 = vmatpush1.msra.mxu0 %v1585
    %1799 = vmatprep.subr.mxu0 %v1584
    %1800 = vmatpush1.msra.mxu0 %v1583
    %1801 = vmatprep.subr.mxu0 %v1582
    %1802 = vmatpush1.msra.mxu0 %v1581
    %1803 = vmatprep.subr.mxu0 %v1580
    %1804 = vmatpush1.msra.mxu0 %v1579
    %1805 = vmatprep.subr.mxu0 %v1578
    %1806 = vmatpush1.msra.mxu0 %v1577
    %1807 = vmatprep.subr.mxu0 %v1576
    %1808 = vmatpush1.msra.mxu0 %v1575
    %1809 = vmatprep.subr.mxu0 %v1574
    %1810 = vmatpush1.msra.mxu0 %v1573
    %1811 = vmatprep.subr.mxu0 %v1636
    %1812 = vmatpush2.msra.mxu0 %v1635
    %1813 = vmatprep.subr.mxu0 %v1634
    %1814 = vmatpush2.msra.mxu0 %v1633
    %1815 = vmatprep.subr.mxu0 %v1632
    %1816 = vmatpush2.msra.mxu0 %v1631
    %1817 = vmatprep.subr.mxu0 %v1630
    %1818 = vmatpush2.msra.mxu0 %v1629
    %1819 = vmatprep.subr.mxu0 %v1628
    %1820 = vmatpush2.msra.mxu0 %v1627
    %1821 = vmatprep.subr.mxu0 %v1626
    %1822 = vmatpush2.msra.mxu0 %v1625
    %1823 = vmatprep.subr.mxu0 %v1624
    %1824 = vmatpush2.msra.mxu0 %v1623
    %1825 = vmatprep.subr.mxu0 %v1622
    %1826 = vmatpush2.msra.mxu0 %v1621
    %1827 = vmatprep.subr.mxu0 %v1620
    %1828 = vmatpush2.msra.mxu0 %v1619
    %1829 = vmatprep.subr.mxu0 %v1618
    %1830 = vmatpush2.msra.mxu0 %v1617
    %1831 = vmatprep.subr.mxu0 %v1616
    %1832 = vmatpush2.msra.mxu0 %v1615
    %1833 = vmatprep.subr.mxu0 %v1614
    %1834 = vmatpush2.msra.mxu0 %v1613
    %1835 = vmatprep.subr.mxu0 %v1612
    %1836 = vmatpush2.msra.mxu0 %v1611
    %1837 = vmatprep.subr.mxu0 %v1610
    %1838 = vmatpush2.msra.mxu0 %v1609
    %1839 = vmatprep.subr.mxu0 %v1608
    %1840 = vmatpush2.msra.mxu0 %v1607
    %1841 = vmatprep.subr.mxu0 %v1606
    %1842 = vmatpush2.msra.mxu0 %v1605
    %1843 = vmatprep.mubr.f32.mxu0 %v1545
    %1844 = vmatmul.mubr.f32.gmra.mxu0 %v1544
    %v1845 = vpop.f32.mrf.mxu0
    %v1846 = vadd.f32 %v1769, %v1845
    %v1847 = vpop.f32.mrf.mxu0
    %v1848 = vadd.f32 %v1771, %v1847
    %1849 = vmatprep.mubr.f32.mxu0 %v1547
    %1850 = vmatmul.mubr.f32.gmra.mxu0 %v1546
    %v1851 = vpop.f32.mrf.mxu0
    %v1852 = vadd.f32 %v1775, %v1851
    %v1853 = vpop.f32.mrf.mxu0
    %v1854 = vadd.f32 %v1777, %v1853
    %1855 = vdwg.mxu0
    %s1856 = scalar_lea.vmem [#allocation4], 5632
    %v1857 = vld [vmem:[%s1856] sm:$0xff]
    %v1858 = vld [vmem:[%s1856 + $0x8] sm:$0xff]
    %v1859 = vld [vmem:[%s1856 + $0x10] sm:$0xff]
    %v1860 = vld [vmem:[%s1856 + $0x18] sm:$0xff]
    %v1861 = vld [vmem:[%s1856 + $0x20] sm:$0xff]
    %v1862 = vld [vmem:[%s1856 + $0x28] sm:$0xff]
    %v1863 = vld [vmem:[%s1856 + $0x30] sm:$0xff]
    %v1864 = vld [vmem:[%s1856 + $0x38] sm:$0xff]
    %v1865 = vld [vmem:[%s1856 + $0x40] sm:$0xff]
    %v1866 = vld [vmem:[%s1856 + $0x48] sm:$0xff]
    %v1867 = vld [vmem:[%s1856 + $0x50] sm:$0xff]
    %v1868 = vld [vmem:[%s1856 + $0x58] sm:$0xff]
    %v1869 = vld [vmem:[%s1856 + $0x60] sm:$0xff]
    %v1870 = vld [vmem:[%s1856 + $0x68] sm:$0xff]
    %v1871 = vld [vmem:[%s1856 + $0x70] sm:$0xff]
    %v1872 = vld [vmem:[%s1856 + $0x78] sm:$0xff]
    %v1873 = vld [vmem:[%s1856 + $0x80] sm:$0xff]
    %v1874 = vld [vmem:[%s1856 + $0x88] sm:$0xff]
    %v1875 = vld [vmem:[%s1856 + $0x90] sm:$0xff]
    %v1876 = vld [vmem:[%s1856 + $0x98] sm:$0xff]
    %v1877 = vld [vmem:[%s1856 + $0xa0] sm:$0xff]
    %v1878 = vld [vmem:[%s1856 + $0xa8] sm:$0xff]
    %v1879 = vld [vmem:[%s1856 + $0xb0] sm:$0xff]
    %v1880 = vld [vmem:[%s1856 + $0xb8] sm:$0xff]
    %v1881 = vld [vmem:[%s1856 + $0xc0] sm:$0xff]
    %v1882 = vld [vmem:[%s1856 + $0xc8] sm:$0xff]
    %v1883 = vld [vmem:[%s1856 + $0xd0] sm:$0xff]
    %v1884 = vld [vmem:[%s1856 + $0xd8] sm:$0xff]
    %v1885 = vld [vmem:[%s1856 + $0xe0] sm:$0xff]
    %v1886 = vld [vmem:[%s1856 + $0xe8] sm:$0xff]
    %v1887 = vld [vmem:[%s1856 + $0xf0] sm:$0xff]
    %v1888 = vld [vmem:[%s1856 + $0xf8] sm:$0xff]
    %v1889 = vld [vmem:[%s1856 + $0x100] sm:$0xff]
    %v1890 = vld [vmem:[%s1856 + $0x108] sm:$0xff]
    %v1891 = vld [vmem:[%s1856 + $0x110] sm:$0xff]
    %v1892 = vld [vmem:[%s1856 + $0x118] sm:$0xff]
    %v1893 = vld [vmem:[%s1856 + $0x120] sm:$0xff]
    %v1894 = vld [vmem:[%s1856 + $0x128] sm:$0xff]
    %v1895 = vld [vmem:[%s1856 + $0x130] sm:$0xff]
    %v1896 = vld [vmem:[%s1856 + $0x138] sm:$0xff]
    %v1897 = vld [vmem:[%s1856 + $0x140] sm:$0xff]
    %v1898 = vld [vmem:[%s1856 + $0x148] sm:$0xff]
    %v1899 = vld [vmem:[%s1856 + $0x150] sm:$0xff]
    %v1900 = vld [vmem:[%s1856 + $0x158] sm:$0xff]
    %v1901 = vld [vmem:[%s1856 + $0x160] sm:$0xff]
    %v1902 = vld [vmem:[%s1856 + $0x168] sm:$0xff]
    %v1903 = vld [vmem:[%s1856 + $0x170] sm:$0xff]
    %v1904 = vld [vmem:[%s1856 + $0x178] sm:$0xff]
    %v1905 = vld [vmem:[%s1856 + $0x180] sm:$0xff]
    %v1906 = vld [vmem:[%s1856 + $0x188] sm:$0xff]
    %v1907 = vld [vmem:[%s1856 + $0x190] sm:$0xff]
    %v1908 = vld [vmem:[%s1856 + $0x198] sm:$0xff]
    %v1909 = vld [vmem:[%s1856 + $0x1a0] sm:$0xff]
    %v1910 = vld [vmem:[%s1856 + $0x1a8] sm:$0xff]
    %v1911 = vld [vmem:[%s1856 + $0x1b0] sm:$0xff]
    %v1912 = vld [vmem:[%s1856 + $0x1b8] sm:$0xff]
    %v1913 = vld [vmem:[%s1856 + $0x1c0] sm:$0xff]
    %v1914 = vld [vmem:[%s1856 + $0x1c8] sm:$0xff]
    %v1915 = vld [vmem:[%s1856 + $0x1d0] sm:$0xff]
    %v1916 = vld [vmem:[%s1856 + $0x1d8] sm:$0xff]
    %v1917 = vld [vmem:[%s1856 + $0x1e0] sm:$0xff]
    %v1918 = vld [vmem:[%s1856 + $0x1e8] sm:$0xff]
    %v1919 = vld [vmem:[%s1856 + $0x1f0] sm:$0xff]
    %v1920 = vld [vmem:[%s1856 + $0x1f8] sm:$0xff]
    %1921 = vmatprep.subr.mxu0 %v1888
    %1922 = vmatpush1.msra.mxu0 %v1887
    %1923 = vmatprep.subr.mxu0 %v1886
    %1924 = vmatpush1.msra.mxu0 %v1885
    %1925 = vmatprep.subr.mxu0 %v1884
    %1926 = vmatpush1.msra.mxu0 %v1883
    %1927 = vmatprep.subr.mxu0 %v1882
    %1928 = vmatpush1.msra.mxu0 %v1881
    %1929 = vmatprep.subr.mxu0 %v1880
    %1930 = vmatpush1.msra.mxu0 %v1879
    %1931 = vmatprep.subr.mxu0 %v1878
    %1932 = vmatpush1.msra.mxu0 %v1877
    %1933 = vmatprep.subr.mxu0 %v1876
    %1934 = vmatpush1.msra.mxu0 %v1875
    %1935 = vmatprep.subr.mxu0 %v1874
    %1936 = vmatpush1.msra.mxu0 %v1873
    %1937 = vmatprep.subr.mxu0 %v1872
    %1938 = vmatpush1.msra.mxu0 %v1871
    %1939 = vmatprep.subr.mxu0 %v1870
    %1940 = vmatpush1.msra.mxu0 %v1869
    %1941 = vmatprep.subr.mxu0 %v1868
    %1942 = vmatpush1.msra.mxu0 %v1867
    %1943 = vmatprep.subr.mxu0 %v1866
    %1944 = vmatpush1.msra.mxu0 %v1865
    %1945 = vmatprep.subr.mxu0 %v1864
    %1946 = vmatpush1.msra.mxu0 %v1863
    %1947 = vmatprep.subr.mxu0 %v1862
    %1948 = vmatpush1.msra.mxu0 %v1861
    %1949 = vmatprep.subr.mxu0 %v1860
    %1950 = vmatpush1.msra.mxu0 %v1859
    %1951 = vmatprep.subr.mxu0 %v1858
    %1952 = vmatpush1.msra.mxu0 %v1857
    %1953 = vmatprep.subr.mxu0 %v1920
    %1954 = vmatpush2.msra.mxu0 %v1919
    %1955 = vmatprep.subr.mxu0 %v1918
    %1956 = vmatpush2.msra.mxu0 %v1917
    %1957 = vmatprep.subr.mxu0 %v1916
    %1958 = vmatpush2.msra.mxu0 %v1915
    %1959 = vmatprep.subr.mxu0 %v1914
    %1960 = vmatpush2.msra.mxu0 %v1913
    %1961 = vmatprep.subr.mxu0 %v1912
    %1962 = vmatpush2.msra.mxu0 %v1911
    %1963 = vmatprep.subr.mxu0 %v1910
    %1964 = vmatpush2.msra.mxu0 %v1909
    %1965 = vmatprep.subr.mxu0 %v1908
    %1966 = vmatpush2.msra.mxu0 %v1907
    %1967 = vmatprep.subr.mxu0 %v1906
    %1968 = vmatpush2.msra.mxu0 %v1905
    %1969 = vmatprep.subr.mxu0 %v1904
    %1970 = vmatpush2.msra.mxu0 %v1903
    %1971 = vmatprep.subr.mxu0 %v1902
    %1972 = vmatpush2.msra.mxu0 %v1901
    %1973 = vmatprep.subr.mxu0 %v1900
    %1974 = vmatpush2.msra.mxu0 %v1899
    %1975 = vmatprep.subr.mxu0 %v1898
    %1976 = vmatpush2.msra.mxu0 %v1897
    %1977 = vmatprep.subr.mxu0 %v1896
    %1978 = vmatpush2.msra.mxu0 %v1895
    %1979 = vmatprep.subr.mxu0 %v1894
    %1980 = vmatpush2.msra.mxu0 %v1893
    %1981 = vmatprep.subr.mxu0 %v1892
    %1982 = vmatpush2.msra.mxu0 %v1891
    %1983 = vmatprep.subr.mxu0 %v1890
    %1984 = vmatpush2.msra.mxu0 %v1889
    %1985 = vmatprep.mubr.f32.mxu0 %v1569
    %1986 = vmatmul.mubr.f32.gmra.mxu0 %v1568
    %v1987 = vpop.f32.mrf.mxu0
    %v1988 = vadd.f32 0.0, %v1987
    %v1989 = vpop.f32.mrf.mxu0
    %v1990 = vadd.f32 0.0, %v1989
    %1991 = vmatprep.mubr.f32.mxu0 %v1571
    %1992 = vmatmul.mubr.f32.gmra.mxu0 %v1570
    %v1993 = vpop.f32.mrf.mxu0
    %v1994 = vadd.f32 0.0, %v1993
    %v1995 = vpop.f32.mrf.mxu0
    %v1996 = vadd.f32 0.0, %v1995
    %1997 = vdwg.mxu0
    %v1998 = vadd.f32 %v1846, %v1988
    %v1999 = vadd.f32 %v1848, %v1990
    %v2000 = vadd.f32 %v1852, %v1994
    %v2001 = vadd.f32 %v1854, %v1996
    %s2002 = scalar_lea.vmem [#allocation6], 6
    %v2003 = vld [vmem:[%s2002] sm:$0x3]
    %v2005 = vlaneseq
    %v2006 = vshrl.u32 %v2005, 7
    %v2007 = vsub.s32 0, %v2006
    %v2008 = vrot.slane %v2003, %v2007
    %v2009 = vlaneseq
    %v2010 = vshrl.u32 %v2009, 7
    %v2011 = vsub.s32 1, %v2010
    %v2012 = vrot.slane %v2003, %v2011
    %v2015 = vadd.f32 %v1998, %v2008
    %v2016 = vadd.f32 %v1999, %v2012
    %v2017 = vadd.f32 %v2000, %v2008
    %v2018 = vadd.f32 %v2001, %v2012
    %v2019 = vadd.f32 %v2015, %v1069
    %v2020 = vadd.f32 %v2016, %v1070
    %v2021 = vadd.f32 %v2017, %v1071
    %v2022 = vadd.f32 %v2018, %v1072
    %v2023 = vmax.f32 %v2019, 0.0
    %v2024 = vmax.f32 %v2020, 0.0
    %v2025 = vmax.f32 %v2021, 0.0
    %v2026 = vmax.f32 %v2022, 0.0
    %v2027 = vrot.slane %v2023, 7
    %v2028 = vrot.slane %v2024, 7
    %v2029 = vrot.slane %v2025, 7
    %v2030 = vrot.slane %v2026, 7
    %v2031 = vsel %vm123, %v2027, %v2029
    %v2032 = vsel %vm123, %v2028, %v2030
    %v2033 = vsel %vm123, %v2029, %v2027
    %v2034 = vsel %vm123, %v2030, %v2028
    %v2035 = vmul.f32 %v107, %v2033
    %v2036 = vmul.f32 %v107, %v2034
    %v2037 = vmul.f32 %v108, %v2031
    %v2038 = vmul.f32 %v108, %v2032
    %v2039 = vrot.slane %v2023, 1
    %v2040 = vrot.slane %v2024, 1
    %v2041 = vrot.slane %v2025, 1
    %v2042 = vrot.slane %v2026, 1
    %v2043 = vsel %vm136, %v2039, %v2041
    %v2044 = vsel %vm136, %v2040, %v2042
    %v2045 = vsel %vm136, %v2041, %v2039
    %v2046 = vsel %vm136, %v2042, %v2040
    %v2047 = vmul.f32 %v113, %v2043
    %v2048 = vmul.f32 %v113, %v2044
    %v2049 = vmul.f32 %v114, %v2045
    %v2050 = vmul.f32 %v114, %v2046
    %s2051 = scalar_lea.vmem %s4, 256
    %v2052 = vld [vmem:[%s2051] sm:$0xff]
    %v2053 = vld [vmem:[%s2051 + $0x8] sm:$0xff]
    %v2054 = vld [vmem:[%s2051 + $0x10] sm:$0xff]
    %v2055 = vld [vmem:[%s2051 + $0x18] sm:$0xff]
    %v2056 = vld [vmem:[%s2051 + $0x20] sm:$0xff]
    %v2057 = vld [vmem:[%s2051 + $0x28] sm:$0xff]
    %v2058 = vld [vmem:[%s2051 + $0x30] sm:$0xff]
    %v2059 = vld [vmem:[%s2051 + $0x38] sm:$0xff]
    %v2060 = vld [vmem:[%s2051 + $0x40] sm:$0xff]
    %v2061 = vld [vmem:[%s2051 + $0x48] sm:$0xff]
    %v2062 = vld [vmem:[%s2051 + $0x50] sm:$0xff]
    %v2063 = vld [vmem:[%s2051 + $0x58] sm:$0xff]
    %v2064 = vld [vmem:[%s2051 + $0x60] sm:$0xff]
    %v2065 = vld [vmem:[%s2051 + $0x68] sm:$0xff]
    %v2066 = vld [vmem:[%s2051 + $0x70] sm:$0xff]
    %v2067 = vld [vmem:[%s2051 + $0x78] sm:$0xff]
    %v2068 = vld [vmem:[%s2051 + $0x80] sm:$0xff]
    %v2069 = vld [vmem:[%s2051 + $0x88] sm:$0xff]
    %v2070 = vld [vmem:[%s2051 + $0x90] sm:$0xff]
    %v2071 = vld [vmem:[%s2051 + $0x98] sm:$0xff]
    %v2072 = vld [vmem:[%s2051 + $0xa0] sm:$0xff]
    %v2073 = vld [vmem:[%s2051 + $0xa8] sm:$0xff]
    %v2074 = vld [vmem:[%s2051 + $0xb0] sm:$0xff]
    %v2075 = vld [vmem:[%s2051 + $0xb8] sm:$0xff]
    %v2076 = vld [vmem:[%s2051 + $0xc0] sm:$0xff]
    %v2077 = vld [vmem:[%s2051 + $0xc8] sm:$0xff]
    %v2078 = vld [vmem:[%s2051 + $0xd0] sm:$0xff]
    %v2079 = vld [vmem:[%s2051 + $0xd8] sm:$0xff]
    %v2080 = vld [vmem:[%s2051 + $0xe0] sm:$0xff]
    %v2081 = vld [vmem:[%s2051 + $0xe8] sm:$0xff]
    %v2082 = vld [vmem:[%s2051 + $0xf0] sm:$0xff]
    %v2083 = vld [vmem:[%s2051 + $0xf8] sm:$0xff]
    %v2084 = vld [vmem:[%s4] sm:$0xff]
    %v2085 = vld [vmem:[%s4 + $0x8] sm:$0xff]
    %v2086 = vld [vmem:[%s4 + $0x10] sm:$0xff]
    %v2087 = vld [vmem:[%s4 + $0x18] sm:$0xff]
    %v2088 = vld [vmem:[%s4 + $0x20] sm:$0xff]
    %v2089 = vld [vmem:[%s4 + $0x28] sm:$0xff]
    %v2090 = vld [vmem:[%s4 + $0x30] sm:$0xff]
    %v2091 = vld [vmem:[%s4 + $0x38] sm:$0xff]
    %v2092 = vld [vmem:[%s4 + $0x40] sm:$0xff]
    %v2093 = vld [vmem:[%s4 + $0x48] sm:$0xff]
    %v2094 = vld [vmem:[%s4 + $0x50] sm:$0xff]
    %v2095 = vld [vmem:[%s4 + $0x58] sm:$0xff]
    %v2096 = vld [vmem:[%s4 + $0x60] sm:$0xff]
    %v2097 = vld [vmem:[%s4 + $0x68] sm:$0xff]
    %v2098 = vld [vmem:[%s4 + $0x70] sm:$0xff]
    %v2099 = vld [vmem:[%s4 + $0x78] sm:$0xff]
    %v2100 = vld [vmem:[%s4 + $0x80] sm:$0xff]
    %v2101 = vld [vmem:[%s4 + $0x88] sm:$0xff]
    %v2102 = vld [vmem:[%s4 + $0x90] sm:$0xff]
    %v2103 = vld [vmem:[%s4 + $0x98] sm:$0xff]
    %v2104 = vld [vmem:[%s4 + $0xa0] sm:$0xff]
    %v2105 = vld [vmem:[%s4 + $0xa8] sm:$0xff]
    %v2106 = vld [vmem:[%s4 + $0xb0] sm:$0xff]
    %v2107 = vld [vmem:[%s4 + $0xb8] sm:$0xff]
    %v2108 = vld [vmem:[%s4 + $0xc0] sm:$0xff]
    %v2109 = vld [vmem:[%s4 + $0xc8] sm:$0xff]
    %v2110 = vld [vmem:[%s4 + $0xd0] sm:$0xff]
    %v2111 = vld [vmem:[%s4 + $0xd8] sm:$0xff]
    %v2112 = vld [vmem:[%s4 + $0xe0] sm:$0xff]
    %v2113 = vld [vmem:[%s4 + $0xe8] sm:$0xff]
    %v2114 = vld [vmem:[%s4 + $0xf0] sm:$0xff]
    %v2115 = vld [vmem:[%s4 + $0xf8] sm:$0xff]
    %2116 = vmatprep.subr.mxu0 0.0
    %2117 = vmatpush1.msra.mxu0 %v2099
    %2118 = vmatprep.subr.mxu0 0.0
    %2119 = vmatpush1.msra.mxu0 %v2098
    %2120 = vmatprep.subr.mxu0 0.0
    %2121 = vmatpush1.msra.mxu0 %v2097
    %2122 = vmatprep.subr.mxu0 0.0
    %2123 = vmatpush1.msra.mxu0 %v2096
    %2124 = vmatprep.subr.mxu0 0.0
    %2125 = vmatpush1.msra.mxu0 %v2095
    %2126 = vmatprep.subr.mxu0 0.0
    %2127 = vmatpush1.msra.mxu0 %v2094
    %2128 = vmatprep.subr.mxu0 0.0
    %2129 = vmatpush1.msra.mxu0 %v2093
    %2130 = vmatprep.subr.mxu0 0.0
    %2131 = vmatpush1.msra.mxu0 %v2092
    %2132 = vmatprep.subr.mxu0 0.0
    %2133 = vmatpush1.msra.mxu0 %v2091
    %2134 = vmatprep.subr.mxu0 0.0
    %2135 = vmatpush1.msra.mxu0 %v2090
    %2136 = vmatprep.subr.mxu0 0.0
    %2137 = vmatpush1.msra.mxu0 %v2089
    %2138 = vmatprep.subr.mxu0 0.0
    %2139 = vmatpush1.msra.mxu0 %v2088
    %2140 = vmatprep.subr.mxu0 0.0
    %2141 = vmatpush1.msra.mxu0 %v2087
    %2142 = vmatprep.subr.mxu0 0.0
    %2143 = vmatpush1.msra.mxu0 %v2086
    %2144 = vmatprep.subr.mxu0 0.0
    %2145 = vmatpush1.msra.mxu0 %v2085
    %2146 = vmatprep.subr.mxu0 0.0
    %2147 = vmatpush1.msra.mxu0 %v2084
    %2148 = vmatprep.subr.mxu0 0.0
    %2149 = vmatpush2.msra.mxu0 %v2115
    %2150 = vmatprep.subr.mxu0 0.0
    %2151 = vmatpush2.msra.mxu0 %v2114
    %2152 = vmatprep.subr.mxu0 0.0
    %2153 = vmatpush2.msra.mxu0 %v2113
    %2154 = vmatprep.subr.mxu0 0.0
    %2155 = vmatpush2.msra.mxu0 %v2112
    %2156 = vmatprep.subr.mxu0 0.0
    %2157 = vmatpush2.msra.mxu0 %v2111
    %2158 = vmatprep.subr.mxu0 0.0
    %2159 = vmatpush2.msra.mxu0 %v2110
    %2160 = vmatprep.subr.mxu0 0.0
    %2161 = vmatpush2.msra.mxu0 %v2109
    %2162 = vmatprep.subr.mxu0 0.0
    %2163 = vmatpush2.msra.mxu0 %v2108
    %2164 = vmatprep.subr.mxu0 0.0
    %2165 = vmatpush2.msra.mxu0 %v2107
    %2166 = vmatprep.subr.mxu0 0.0
    %2167 = vmatpush2.msra.mxu0 %v2106
    %2168 = vmatprep.subr.mxu0 0.0
    %2169 = vmatpush2.msra.mxu0 %v2105
    %2170 = vmatprep.subr.mxu0 0.0
    %2171 = vmatpush2.msra.mxu0 %v2104
    %2172 = vmatprep.subr.mxu0 0.0
    %2173 = vmatpush2.msra.mxu0 %v2103
    %2174 = vmatprep.subr.mxu0 0.0
    %2175 = vmatpush2.msra.mxu0 %v2102
    %2176 = vmatprep.subr.mxu0 0.0
    %2177 = vmatpush2.msra.mxu0 %v2101
    %2178 = vmatprep.subr.mxu0 0.0
    %2179 = vmatpush2.msra.mxu0 %v2100
    %2180 = vmatprep.mubr.f32.mxu0 %v2036
    %2181 = vmatmul.mubr.f32.gmra.mxu0 %v2035
    %v2182 = vpop.f32.mrf.mxu0
    %v2183 = vadd.f32 0.0, %v2182
    %v2184 = vpop.f32.mrf.mxu0
    %2185 = vmatprep.mubr.f32.mxu0 %v2038
    %2186 = vmatmul.mubr.f32.gmra.mxu0 %v2037
    %v2187 = vpop.f32.mrf.mxu0
    %v2188 = vadd.f32 0.0, %v2187
    %v2189 = vpop.f32.mrf.mxu0
    %2190 = vdwg.mxu0
    %2191 = vmatprep.subr.mxu0 0.0
    %2192 = vmatpush1.msra.mxu0 %v2067
    %2193 = vmatprep.subr.mxu0 0.0
    %2194 = vmatpush1.msra.mxu0 %v2066
    %2195 = vmatprep.subr.mxu0 0.0
    %2196 = vmatpush1.msra.mxu0 %v2065
    %2197 = vmatprep.subr.mxu0 0.0
    %2198 = vmatpush1.msra.mxu0 %v2064
    %2199 = vmatprep.subr.mxu0 0.0
    %2200 = vmatpush1.msra.mxu0 %v2063
    %2201 = vmatprep.subr.mxu0 0.0
    %2202 = vmatpush1.msra.mxu0 %v2062
    %2203 = vmatprep.subr.mxu0 0.0
    %2204 = vmatpush1.msra.mxu0 %v2061
    %2205 = vmatprep.subr.mxu0 0.0
    %2206 = vmatpush1.msra.mxu0 %v2060
    %2207 = vmatprep.subr.mxu0 0.0
    %2208 = vmatpush1.msra.mxu0 %v2059
    %2209 = vmatprep.subr.mxu0 0.0
    %2210 = vmatpush1.msra.mxu0 %v2058
    %2211 = vmatprep.subr.mxu0 0.0
    %2212 = vmatpush1.msra.mxu0 %v2057
    %2213 = vmatprep.subr.mxu0 0.0
    %2214 = vmatpush1.msra.mxu0 %v2056
    %2215 = vmatprep.subr.mxu0 0.0
    %2216 = vmatpush1.msra.mxu0 %v2055
    %2217 = vmatprep.subr.mxu0 0.0
    %2218 = vmatpush1.msra.mxu0 %v2054
    %2219 = vmatprep.subr.mxu0 0.0
    %2220 = vmatpush1.msra.mxu0 %v2053
    %2221 = vmatprep.subr.mxu0 0.0
    %2222 = vmatpush1.msra.mxu0 %v2052
    %2223 = vmatprep.subr.mxu0 0.0
    %2224 = vmatpush2.msra.mxu0 %v2083
    %2225 = vmatprep.subr.mxu0 0.0
    %2226 = vmatpush2.msra.mxu0 %v2082
    %2227 = vmatprep.subr.mxu0 0.0
    %2228 = vmatpush2.msra.mxu0 %v2081
    %2229 = vmatprep.subr.mxu0 0.0
    %2230 = vmatpush2.msra.mxu0 %v2080
    %2231 = vmatprep.subr.mxu0 0.0
    %2232 = vmatpush2.msra.mxu0 %v2079
    %2233 = vmatprep.subr.mxu0 0.0
    %2234 = vmatpush2.msra.mxu0 %v2078
    %2235 = vmatprep.subr.mxu0 0.0
    %2236 = vmatpush2.msra.mxu0 %v2077
    %2237 = vmatprep.subr.mxu0 0.0
    %2238 = vmatpush2.msra.mxu0 %v2076
    %2239 = vmatprep.subr.mxu0 0.0
    %2240 = vmatpush2.msra.mxu0 %v2075
    %2241 = vmatprep.subr.mxu0 0.0
    %2242 = vmatpush2.msra.mxu0 %v2074
    %2243 = vmatprep.subr.mxu0 0.0
    %2244 = vmatpush2.msra.mxu0 %v2073
    %2245 = vmatprep.subr.mxu0 0.0
    %2246 = vmatpush2.msra.mxu0 %v2072
    %2247 = vmatprep.subr.mxu0 0.0
    %2248 = vmatpush2.msra.mxu0 %v2071
    %2249 = vmatprep.subr.mxu0 0.0
    %2250 = vmatpush2.msra.mxu0 %v2070
    %2251 = vmatprep.subr.mxu0 0.0
    %2252 = vmatpush2.msra.mxu0 %v2069
    %2253 = vmatprep.subr.mxu0 0.0
    %2254 = vmatpush2.msra.mxu0 %v2068
    %2255 = vmatprep.mubr.f32.mxu0 %v2024
    %2256 = vmatmul.mubr.f32.gmra.mxu0 %v2023
    %v2257 = vpop.f32.mrf.mxu0
    %v2258 = vadd.f32 %v2183, %v2257
    %v2259 = vpop.f32.mrf.mxu0
    %2260 = vmatprep.mubr.f32.mxu0 %v2026
    %2261 = vmatmul.mubr.f32.gmra.mxu0 %v2025
    %v2262 = vpop.f32.mrf.mxu0
    %v2263 = vadd.f32 %v2188, %v2262
    %v2264 = vpop.f32.mrf.mxu0
    %2265 = vdwg.mxu0
    %s2266 = scalar_lea.vmem %s4, 512
    %v2267 = vld [vmem:[%s2266] sm:$0xff]
    %v2268 = vld [vmem:[%s2266 + $0x8] sm:$0xff]
    %v2269 = vld [vmem:[%s2266 + $0x10] sm:$0xff]
    %v2270 = vld [vmem:[%s2266 + $0x18] sm:$0xff]
    %v2271 = vld [vmem:[%s2266 + $0x20] sm:$0xff]
    %v2272 = vld [vmem:[%s2266 + $0x28] sm:$0xff]
    %v2273 = vld [vmem:[%s2266 + $0x30] sm:$0xff]
    %v2274 = vld [vmem:[%s2266 + $0x38] sm:$0xff]
    %v2275 = vld [vmem:[%s2266 + $0x40] sm:$0xff]
    %v2276 = vld [vmem:[%s2266 + $0x48] sm:$0xff]
    %v2277 = vld [vmem:[%s2266 + $0x50] sm:$0xff]
    %v2278 = vld [vmem:[%s2266 + $0x58] sm:$0xff]
    %v2279 = vld [vmem:[%s2266 + $0x60] sm:$0xff]
    %v2280 = vld [vmem:[%s2266 + $0x68] sm:$0xff]
    %v2281 = vld [vmem:[%s2266 + $0x70] sm:$0xff]
    %v2282 = vld [vmem:[%s2266 + $0x78] sm:$0xff]
    %v2283 = vld [vmem:[%s2266 + $0x80] sm:$0xff]
    %v2284 = vld [vmem:[%s2266 + $0x88] sm:$0xff]
    %v2285 = vld [vmem:[%s2266 + $0x90] sm:$0xff]
    %v2286 = vld [vmem:[%s2266 + $0x98] sm:$0xff]
    %v2287 = vld [vmem:[%s2266 + $0xa0] sm:$0xff]
    %v2288 = vld [vmem:[%s2266 + $0xa8] sm:$0xff]
    %v2289 = vld [vmem:[%s2266 + $0xb0] sm:$0xff]
    %v2290 = vld [vmem:[%s2266 + $0xb8] sm:$0xff]
    %v2291 = vld [vmem:[%s2266 + $0xc0] sm:$0xff]
    %v2292 = vld [vmem:[%s2266 + $0xc8] sm:$0xff]
    %v2293 = vld [vmem:[%s2266 + $0xd0] sm:$0xff]
    %v2294 = vld [vmem:[%s2266 + $0xd8] sm:$0xff]
    %v2295 = vld [vmem:[%s2266 + $0xe0] sm:$0xff]
    %v2296 = vld [vmem:[%s2266 + $0xe8] sm:$0xff]
    %v2297 = vld [vmem:[%s2266 + $0xf0] sm:$0xff]
    %v2298 = vld [vmem:[%s2266 + $0xf8] sm:$0xff]
    %2299 = vmatprep.subr.mxu0 0.0
    %2300 = vmatpush1.msra.mxu0 %v2282
    %2301 = vmatprep.subr.mxu0 0.0
    %2302 = vmatpush1.msra.mxu0 %v2281
    %2303 = vmatprep.subr.mxu0 0.0
    %2304 = vmatpush1.msra.mxu0 %v2280
    %2305 = vmatprep.subr.mxu0 0.0
    %2306 = vmatpush1.msra.mxu0 %v2279
    %2307 = vmatprep.subr.mxu0 0.0
    %2308 = vmatpush1.msra.mxu0 %v2278
    %2309 = vmatprep.subr.mxu0 0.0
    %2310 = vmatpush1.msra.mxu0 %v2277
    %2311 = vmatprep.subr.mxu0 0.0
    %2312 = vmatpush1.msra.mxu0 %v2276
    %2313 = vmatprep.subr.mxu0 0.0
    %2314 = vmatpush1.msra.mxu0 %v2275
    %2315 = vmatprep.subr.mxu0 0.0
    %2316 = vmatpush1.msra.mxu0 %v2274
    %2317 = vmatprep.subr.mxu0 0.0
    %2318 = vmatpush1.msra.mxu0 %v2273
    %2319 = vmatprep.subr.mxu0 0.0
    %2320 = vmatpush1.msra.mxu0 %v2272
    %2321 = vmatprep.subr.mxu0 0.0
    %2322 = vmatpush1.msra.mxu0 %v2271
    %2323 = vmatprep.subr.mxu0 0.0
    %2324 = vmatpush1.msra.mxu0 %v2270
    %2325 = vmatprep.subr.mxu0 0.0
    %2326 = vmatpush1.msra.mxu0 %v2269
    %2327 = vmatprep.subr.mxu0 0.0
    %2328 = vmatpush1.msra.mxu0 %v2268
    %2329 = vmatprep.subr.mxu0 0.0
    %2330 = vmatpush1.msra.mxu0 %v2267
    %2331 = vmatprep.subr.mxu0 0.0
    %2332 = vmatpush2.msra.mxu0 %v2298
    %2333 = vmatprep.subr.mxu0 0.0
    %2334 = vmatpush2.msra.mxu0 %v2297
    %2335 = vmatprep.subr.mxu0 0.0
    %2336 = vmatpush2.msra.mxu0 %v2296
    %2337 = vmatprep.subr.mxu0 0.0
    %2338 = vmatpush2.msra.mxu0 %v2295
    %2339 = vmatprep.subr.mxu0 0.0
    %2340 = vmatpush2.msra.mxu0 %v2294
    %2341 = vmatprep.subr.mxu0 0.0
    %2342 = vmatpush2.msra.mxu0 %v2293
    %2343 = vmatprep.subr.mxu0 0.0
    %2344 = vmatpush2.msra.mxu0 %v2292
    %2345 = vmatprep.subr.mxu0 0.0
    %2346 = vmatpush2.msra.mxu0 %v2291
    %2347 = vmatprep.subr.mxu0 0.0
    %2348 = vmatpush2.msra.mxu0 %v2290
    %2349 = vmatprep.subr.mxu0 0.0
    %2350 = vmatpush2.msra.mxu0 %v2289
    %2351 = vmatprep.subr.mxu0 0.0
    %2352 = vmatpush2.msra.mxu0 %v2288
    %2353 = vmatprep.subr.mxu0 0.0
    %2354 = vmatpush2.msra.mxu0 %v2287
    %2355 = vmatprep.subr.mxu0 0.0
    %2356 = vmatpush2.msra.mxu0 %v2286
    %2357 = vmatprep.subr.mxu0 0.0
    %2358 = vmatpush2.msra.mxu0 %v2285
    %2359 = vmatprep.subr.mxu0 0.0
    %2360 = vmatpush2.msra.mxu0 %v2284
    %2361 = vmatprep.subr.mxu0 0.0
    %2362 = vmatpush2.msra.mxu0 %v2283
    %2363 = vmatprep.mubr.f32.mxu0 %v2048
    %2364 = vmatmul.mubr.f32.gmra.mxu0 %v2047
    %v2365 = vpop.f32.mrf.mxu0
    %v2366 = vadd.f32 0.0, %v2365
    %v2367 = vpop.f32.mrf.mxu0
    %2368 = vmatprep.mubr.f32.mxu0 %v2050
    %2369 = vmatmul.mubr.f32.gmra.mxu0 %v2049
    %v2370 = vpop.f32.mrf.mxu0
    %v2371 = vadd.f32 0.0, %v2370
    %v2372 = vpop.f32.mrf.mxu0
    %2373 = vdwg.mxu0
    %v2374 = vadd.f32 %v2258, %v2366
    %v2375 = vadd.f32 %v2263, %v2371
    %v2376 = vld [vmem:[#allocation7] sm:$0x1]
    %v2378 = vlaneseq
    %v2379 = vshrl.u32 %v2378, 7
    %v2380 = vsub.s32 0, %v2379
    %v2381 = vrot.slane %v2376, %v2380
    %v2383 = vadd.f32 %v2374, %v2381
    %v2384 = vadd.f32 %v2375, %v2381
    %vm2385 = vcmask 64512
    %v2386 = vsel %vm2385, %v2383, -inf
    %2387 = vmax.xlane.f32.xlu0 %v2386
    %v2388 = vpop.xlane.xlu0 %2387
    %v2389 = vsel %vm2385, %v2384, -inf
    %2390 = vmax.xlane.f32.xlu0 %v2389
    %v2391 = vpop.xlane.xlu0 %2390
    %v2392 = vsub.f32 %v2383, %v2388
    %v2393 = vsub.f32 %v2384, %v2391
    %v2394 = vmul.f32 %v2392, 1.442695
    %v2395 = vpow.pop %v2394
    %v2396 = vmul.f32 %v2393, 1.442695
    %v2397 = vpow.pop %v2396
    %v2398 = vsel %vm2385, %v2395, 0.0
    %2399 = vadd.xlane.f32.xlu0 %v2398
    %v2400 = vpop.xlane.xlu0 %2399
    %v2401 = vsel %vm2385, %v2397, 0.0
    %2402 = vadd.xlane.f32.xlu0 %v2401
    %v2403 = vpop.xlane.xlu0 %2402
    %v2404 = vrcp.pop %v2400
    %v2405 = vmul.f32 %v2395, %v2404
    %v2406 = vrcp.pop %v2403
    %v2407 = vmul.f32 %v2397, %v2406
    %v2408 = vld [vmem:[%s1] sm:$0xff]
    %v2409 = vld [vmem:[%s1 + $0x8] sm:$0xff]
    %v2410 = vmul.f32 %v2408, %v2405
    %v2411 = vmul.f32 %v2409, %v2407
    %2412 = vst.msk [vmem:[%s6] sm:$0xff] %vm2385, %v2410
    %2413 = vst.msk [vmem:[%s6 + $0x8] sm:$0xff] %vm2385, %v2411
    // Predicated region
    $region42: #{tpu_custom_call.1} parent=1 // pred_check
      _
    $region43: #{tpu_custom_call.1} parent=1 // pred_check_branch
      %2415 = sbr.rel (0) target = $region45
    $region44: #{tpu_custom_call.1} parent=1 // pred_region
      _
    $region45: #{tpu_custom_call.1} parent=1 // pred_fallthru
      _
    // Predicated region
    $region46: #{tpu_custom_call.1} parent=1 // pred_check
      _
    $region47: #{tpu_custom_call.1} parent=1 // pred_check_branch
      %2417 = sbr.rel (0) target = $region49
    $region48: #{tpu_custom_call.1} parent=1 // pred_region
      _
    $region49: #{tpu_custom_call.1} parent=1 // pred_fallthru
      _
    %2418 = vsyncpa [#allocation3], 1
    %2419 = vsyncpa [#allocation5], 1
    %2420 = vsyncpa [#allocation8], 1

</llo_original>
